<compile_context>
chip_gen: v6e
topology: v6e:2x2x1
jax: 0.10.0
libtpu: 0.0.40
codegen_flags: <defaults>
</compile_context>

<pallas_src>
import jax
import jax.numpy as jnp
from jax import lax
from jax.experimental import pallas as pl
from jax.experimental.pallas import tpu as pltpu


def _residual_dwconv_kernel(w_ref, b_ref, x_ref, o_ref, xp_ref):
    # w_ref : VMEM (9, Cb)  f32   per-tap depthwise weights, tap-major.
    #                             Center tap (index 4) already has +1.0 folded
    #                             in for the residual connection.
    # b_ref : VMEM (1, Cb)  f32   bias (folded BN).
    # x_ref : VMEM (1, H, W, Cb)  input slab, channels-last, input dtype.
    # o_ref : VMEM (1, H, W, Cb)  output slab, channels-last.
    # xp_ref: VMEM (H+2, W+9, Cb) input-dtype halo scratch.  Interior lives at
    #         [1:1+H, 8:8+W, :] (sublane-aligned store); halo columns at
    #         sublane indices 7 and W+8; columns 0..6 are never read.
    H = o_ref.shape[1]
    W = o_ref.shape[2]
    Cb = o_ref.shape[3]

    x = x_ref[0]                                     # (H, W, Cb), input dtype

    # --- border-only zeroing (interior is fully overwritten just below) ----
    zrow = jnp.zeros((1, W + 9, Cb), dtype=xp_ref.dtype)
    xp_ref[0:1, :, :] = zrow                         # top halo row
    xp_ref[H + 1:H + 2, :, :] = zrow                 # bottom halo row
    zcol = jnp.zeros((H, 1, Cb), dtype=xp_ref.dtype)
    xp_ref[1:1 + H, 7:8, :] = zcol                   # left halo column
    xp_ref[1:1 + H, W + 8:W + 9, :] = zcol           # right halo column

    # --- single interior copy of x (aligned: starts at sublane offset 8) ---
    xp_ref[1:1 + H, 8:8 + W, :] = x

    # Center tap (residual +1 already folded into w[4]) + bias.
    acc = w_ref[4:5, :] * x.astype(jnp.float32) + b_ref[...]   # (H, W, Cb)

    # Remaining 8 taps: shifted slabs from the halo buffer, broadcast FMAs.
    for kh in range(3):
        for kw in range(3):
            if kh == 1 and kw == 1:
                continue
            tap = kh * 3 + kw
            wk = w_ref[tap:tap + 1, :]                               # (1, Cb)
            sl = xp_ref[kh:kh + H, 7 + kw:7 + kw + W, :]             # (H, W, Cb)
            acc = acc + wk * sl.astype(jnp.float32)

    o_ref[0] = acc.astype(o_ref.dtype)               # single down-cast


def _pick_c_block(C):
    # Lane-dense channel blocking: multiples of 128 when possible, otherwise
    # the full channel dim (required by the (8,128) / full-dim BlockSpec rule).
    # For MobileMamba channel counts that are not multiples of 128 (144, 200,
    # 272, ...) the tail lane group stores are masked; padding C to 128 is not
    # applied blindly since it can add large amounts of HBM traffic.
    if C % 256 == 0:
        return 256
    if C % 128 == 0:
        return 128
    return C


def residual_dwconv_nhwc(x_nhwc, w, b):
    """out = x + depthwise_conv3x3(x, w, padding=1) + bias   (NHWC layout).

    Hot-path entry point: no layout transposes.  Keep the surrounding model in
    NHWC so the kernel's single read + single write of x is the only HBM
    traffic for this op.

    x_nhwc: (B, H, W, C).  w: (C, 3, 3) or (C, 1, 3, 3).  b: (C,).
    Returns (B, H, W, C).
    """
    B, H, W, C = x_nhwc.shape

    # Tap-major weights, residual folded into the center tap.
    w9c = jnp.reshape(w, (C, 9)).T.astype(jnp.float32)     # (9, C)
    w9c = w9c.at[4, :].add(1.0)                            # (1 + w_center) * x
    b1c = jnp.reshape(b, (1, C)).astype(jnp.float32)       # (1, C)

    c_blk = _pick_c_block(C)
    num_cb = C // c_blk

    # VMEM budget from actual block sizes (double-buffered in/out, resident
    # weights/bias, halo scratch) + headroom; capped at v7x's 64 MiB physical.
    itemsize = jnp.dtype(x_nhwc.dtype).itemsize
    blk_bytes = H * W * c_blk * itemsize
    scratch_bytes = (H + 2) * (W + 9) * c_blk * itemsize
    wb_bytes = (9 + 1) * c_blk * 4 * 2
    vmem_needed = 2 * 2 * blk_bytes + scratch_bytes + wb_bytes
    vmem_limit = min(64 * 1024 * 1024, 2 * vmem_needed + 8 * 1024 * 1024)

    out = pl.pallas_call(
        _residual_dwconv_kernel,
        out_shape=jax.ShapeDtypeStruct((B, H, W, C), x_nhwc.dtype),
        grid_spec=pltpu.PrefetchScalarGridSpec(
            num_scalar_prefetch=0,
            # channel-block outer, batch inner: weight/bias block index is
            # constant across consecutive inner steps -> no re-DMA.
            grid=(num_cb, B),
            in_specs=[
                pl.BlockSpec((9, c_blk), lambda cb, b_: (0, cb)),        # weights
                pl.BlockSpec((1, c_blk), lambda cb, b_: (0, cb)),        # bias
                pl.BlockSpec((1, H, W, c_blk),
                             lambda cb, b_: (b_, 0, 0, cb)),             # x slab
            ],
            out_specs=pl.BlockSpec((1, H, W, c_blk),
                                   lambda cb, b_: (b_, 0, 0, cb)),
            scratch_shapes=[
                pltpu.VMEM((H + 2, W + 9, c_blk), x_nhwc.dtype),
            ],
        ),
        compiler_params=pltpu.CompilerParams(
            dimension_semantics=("parallel", "parallel"),
            vmem_limit_bytes=vmem_limit,
        ),
    )(w9c, b1c, x_nhwc)
    return out


def residual_dwconv_nchw(x_nchw, w, b):
    """NCHW compatibility shim (PyTorch layout) — test/parity plumbing only.

    In a real NHWC model port these transposes do not exist; use
    residual_dwconv_nhwc directly.
    """
    out_nhwc = residual_dwconv_nhwc(jnp.transpose(x_nchw, (0, 2, 3, 1)), w, b)
    return jnp.transpose(out_nhwc, (0, 3, 1, 2))


def _reference_nchw(x, w, b):
    B, C, H, W = x.shape
    y = lax.conv_general_dilated(
        x, jnp.reshape(w, (C, 1, 3, 3)),
        window_strides=(1, 1), padding=((1, 1), (1, 1)),
        dimension_numbers=("NCHW", "OIHW", "NCHW"),
        feature_group_count=C)
    return x + y + b.reshape(1, C, 1, 1)


def _check(B, C, H, W, key):
    kx, kw, kb = jax.random.split(key, 3)
    x_nchw = jax.random.normal(kx, (B, C, H, W), dtype=jnp.float32)
    w = jax.random.normal(kw, (C, 3, 3), dtype=jnp.float32) * 0.1
    b = jax.random.normal(kb, (C,), dtype=jnp.float32) * 0.01

    # Hot path: NHWC in, NHWC out (no per-layer transposes inside the op).
    x_nhwc = jnp.transpose(x_nchw, (0, 2, 3, 1))
    out_nhwc = residual_dwconv_nhwc(x_nhwc, w, b)
    out_nhwc = jax.block_until_ready(out_nhwc)

    ref_nhwc = jnp.transpose(_reference_nchw(x_nchw, w, b), (0, 2, 3, 1))
    assert out_nhwc.shape == (B, H, W, C)
    assert jnp.allclose(out_nhwc, ref_nhwc, atol=1e-5, rtol=1e-5), \
        f"mismatch vs reference at shape B={B} C={C} H={H} W={W}"


if __name__ == "__main__":
    key = jax.random.PRNGKey(0)
    k0, k1 = jax.random.split(key)

    # Module-consistent small shape (PyTorch spec layout: NCHW (2, 4, 16, 16)).
    _check(B=2, C=4, H=16, W=16, key=k0)

    # Additional lane-dense configuration (exercises the unmasked-store path
    # that the tiny C=4 test hides); still small.
    _check(B=1, C=128, H=16, W=16, key=k1)

    print("KERNEL_OK")
</pallas_src>

<mosaic_0001>
module attributes {stable_mosaic.version = 11 : i64} {
  func.func @_residual_dwconv_kernel(%arg0: i32, %arg1: i32, %arg2: memref<9x4xf32, #tpu.memory_space<vmem>>, %arg3: memref<1x4xf32, #tpu.memory_space<vmem>>, %arg4: memref<1x16x16x4xf32, #tpu.memory_space<vmem>>, %arg5: memref<1x16x16x4xf32, #tpu.memory_space<vmem>>, %arg6: memref<18x25x4xf32, #tpu.memory_space<vmem>>) attributes {dimension_semantics = [#tpu.dimension_semantics<parallel>, #tpu.dimension_semantics<parallel>], iteration_bounds = array<i64: 1, 2>, scalar_prefetch = 0 : i64, scratch_operands = 1 : i64, tpu.core_type = #tpu.core_type<tc>, window_params = [{transform_indices = @transform_0, window_bounds = array<i64: 9, 4>}, {transform_indices = @transform_1, window_bounds = array<i64: 1, 4>}, {transform_indices = @transform_2, window_bounds = array<i64: 1, 16, 16, 4>}, {transform_indices = @transform_3, window_bounds = array<i64: 1, 16, 16, 4>}]} {
    %c0 = arith.constant 0 : index
    %c0_0 = arith.constant 0 : index
    %c0_1 = arith.constant 0 : index
    %c0_2 = arith.constant 0 : index
    %0 = vector.load %arg4[%c0, %c0_0, %c0_1, %c0_2] : memref<1x16x16x4xf32, #tpu.memory_space<vmem>>, vector<1x16x16x4xf32>
    %1 = vector.shape_cast %0 : vector<1x16x16x4xf32> to vector<16x16x4xf32>
    %cst = arith.constant 0.000000e+00 : f32
    %2 = vector.broadcast %cst : f32 to vector<1x25x4xf32>
    %c0_3 = arith.constant 0 : index
    %c0_4 = arith.constant 0 : index
    %c0_5 = arith.constant 0 : index
    %3 = vector.load %arg6[%c0_3, %c0_4, %c0_5] : memref<18x25x4xf32, #tpu.memory_space<vmem>>, vector<1x25x4xf32>
    tpu.vector_store %arg6[%c0_3, %c0_4, %c0_5], %2 {strides = array<i32>} : memref<18x25x4xf32, #tpu.memory_space<vmem>>, vector<1x25x4xf32>,
    %c17 = arith.constant 17 : index
    %c0_6 = arith.constant 0 : index
    %c0_7 = arith.constant 0 : index
    %4 = vector.load %arg6[%c17, %c0_6, %c0_7] : memref<18x25x4xf32, #tpu.memory_space<vmem>>, vector<1x25x4xf32>
    tpu.vector_store %arg6[%c17, %c0_6, %c0_7], %2 {strides = array<i32>} : memref<18x25x4xf32, #tpu.memory_space<vmem>>, vector<1x25x4xf32>,
    %cst_8 = arith.constant 0.000000e+00 : f32
    %5 = vector.broadcast %cst_8 : f32 to vector<16x1x4xf32>
    %c1 = arith.constant 1 : index
    %c7 = arith.constant 7 : index
    %c0_9 = arith.constant 0 : index
    %6 = vector.load %arg6[%c1, %c7, %c0_9] : memref<18x25x4xf32, #tpu.memory_space<vmem>>, vector<16x1x4xf32>
    tpu.vector_store %arg6[%c1, %c7, %c0_9], %5 {strides = array<i32>} : memref<18x25x4xf32, #tpu.memory_space<vmem>>, vector<16x1x4xf32>,
    %c1_10 = arith.constant 1 : index
    %c24 = arith.constant 24 : index
    %c0_11 = arith.constant 0 : index
    %7 = vector.load %arg6[%c1_10, %c24, %c0_11] : memref<18x25x4xf32, #tpu.memory_space<vmem>>, vector<16x1x4xf32>
    tpu.vector_store %arg6[%c1_10, %c24, %c0_11], %5 {strides = array<i32>} : memref<18x25x4xf32, #tpu.memory_space<vmem>>, vector<16x1x4xf32>,
    %c1_12 = arith.constant 1 : index
    %c8 = arith.constant 8 : index
    %c0_13 = arith.constant 0 : index
    %8 = vector.load %arg6[%c1_12, %c8, %c0_13] : memref<18x25x4xf32, #tpu.memory_space<vmem>>, vector<16x16x4xf32>
    tpu.vector_store %arg6[%c1_12, %c8, %c0_13], %1 {strides = array<i32>} : memref<18x25x4xf32, #tpu.memory_space<vmem>>, vector<16x16x4xf32>,
    %c4 = arith.constant 4 : index
    %c0_14 = arith.constant 0 : index
    %9 = vector.load %arg2[%c4, %c0_14] : memref<9x4xf32, #tpu.memory_space<vmem>>, vector<1x4xf32>
    %10 = vector.shape_cast %9 : vector<1x4xf32> to vector<1x1x4xf32>
    %11 = vector.broadcast %10 : vector<1x1x4xf32> to vector<16x16x4xf32>
    %12 = arith.mulf %11, %1 : vector<16x16x4xf32>
    %c0_15 = arith.constant 0 : index
    %c0_16 = arith.constant 0 : index
    %13 = vector.load %arg3[%c0_15, %c0_16] : memref<1x4xf32, #tpu.memory_space<vmem>>, vector<1x4xf32>
    %14 = vector.shape_cast %13 : vector<1x4xf32> to vector<1x1x4xf32>
    %15 = vector.broadcast %14 : vector<1x1x4xf32> to vector<16x16x4xf32>
    %16 = arith.addf %12, %15 : vector<16x16x4xf32>
    %c0_17 = arith.constant 0 : index
    %c0_18 = arith.constant 0 : index
    %17 = vector.load %arg2[%c0_17, %c0_18] : memref<9x4xf32, #tpu.memory_space<vmem>>, vector<1x4xf32>
    %c0_19 = arith.constant 0 : index
    %c7_20 = arith.constant 7 : index
    %c0_21 = arith.constant 0 : index
    %18 = vector.load %arg6[%c0_19, %c7_20, %c0_21] : memref<18x25x4xf32, #tpu.memory_space<vmem>>, vector<16x16x4xf32>
    %19 = vector.shape_cast %17 : vector<1x4xf32> to vector<1x1x4xf32>
    %20 = vector.broadcast %19 : vector<1x1x4xf32> to vector<16x16x4xf32>
    %21 = arith.mulf %20, %18 : vector<16x16x4xf32>
    %22 = arith.addf %16, %21 : vector<16x16x4xf32>
    %c1_22 = arith.constant 1 : index
    %c0_23 = arith.constant 0 : index
    %23 = vector.load %arg2[%c1_22, %c0_23] : memref<9x4xf32, #tpu.memory_space<vmem>>, vector<1x4xf32>
    %c0_24 = arith.constant 0 : index
    %c8_25 = arith.constant 8 : index
    %c0_26 = arith.constant 0 : index
    %24 = vector.load %arg6[%c0_24, %c8_25, %c0_26] : memref<18x25x4xf32, #tpu.memory_space<vmem>>, vector<16x16x4xf32>
    %25 = vector.shape_cast %23 : vector<1x4xf32> to vector<1x1x4xf32>
    %26 = vector.broadcast %25 : vector<1x1x4xf32> to vector<16x16x4xf32>
    %27 = arith.mulf %26, %24 : vector<16x16x4xf32>
    %28 = arith.addf %22, %27 : vector<16x16x4xf32>
    %c2 = arith.constant 2 : index
    %c0_27 = arith.constant 0 : index
    %29 = vector.load %arg2[%c2, %c0_27] : memref<9x4xf32, #tpu.memory_space<vmem>>, vector<1x4xf32>
    %c0_28 = arith.constant 0 : index
    %c9 = arith.constant 9 : index
    %c0_29 = arith.constant 0 : index
    %30 = vector.load %arg6[%c0_28, %c9, %c0_29] : memref<18x25x4xf32, #tpu.memory_space<vmem>>, vector<16x16x4xf32>
    %31 = vector.shape_cast %29 : vector<1x4xf32> to vector<1x1x4xf32>
    %32 = vector.broadcast %31 : vector<1x1x4xf32> to vector<16x16x4xf32>
    %33 = arith.mulf %32, %30 : vector<16x16x4xf32>
    %34 = arith.addf %28, %33 : vector<16x16x4xf32>
    %c3 = arith.constant 3 : index
    %c0_30 = arith.constant 0 : index
    %35 = vector.load %arg2[%c3, %c0_30] : memref<9x4xf32, #tpu.memory_space<vmem>>, vector<1x4xf32>
    %c1_31 = arith.constant 1 : index
    %c7_32 = arith.constant 7 : index
    %c0_33 = arith.constant 0 : index
    %36 = vector.load %arg6[%c1_31, %c7_32, %c0_33] : memref<18x25x4xf32, #tpu.memory_space<vmem>>, vector<16x16x4xf32>
    %37 = vector.shape_cast %35 : vector<1x4xf32> to vector<1x1x4xf32>
    %38 = vector.broadcast %37 : vector<1x1x4xf32> to vector<16x16x4xf32>
    %39 = arith.mulf %38, %36 : vector<16x16x4xf32>
    %40 = arith.addf %34, %39 : vector<16x16x4xf32>
    %c5 = arith.constant 5 : index
    %c0_34 = arith.constant 0 : index
    %41 = vector.load %arg2[%c5, %c0_34] : memref<9x4xf32, #tpu.memory_space<vmem>>, vector<1x4xf32>
    %c1_35 = arith.constant 1 : index
    %c9_36 = arith.constant 9 : index
    %c0_37 = arith.constant 0 : index
    %42 = vector.load %arg6[%c1_35, %c9_36, %c0_37] : memref<18x25x4xf32, #tpu.memory_space<vmem>>, vector<16x16x4xf32>
    %43 = vector.shape_cast %41 : vector<1x4xf32> to vector<1x1x4xf32>
    %44 = vector.broadcast %43 : vector<1x1x4xf32> to vector<16x16x4xf32>
    %45 = arith.mulf %44, %42 : vector<16x16x4xf32>
    %46 = arith.addf %40, %45 : vector<16x16x4xf32>
    %c6 = arith.constant 6 : index
    %c0_38 = arith.constant 0 : index
    %47 = vector.load %arg2[%c6, %c0_38] : memref<9x4xf32, #tpu.memory_space<vmem>>, vector<1x4xf32>
    %c2_39 = arith.constant 2 : index
    %c7_40 = arith.constant 7 : index
    %c0_41 = arith.constant 0 : index
    %48 = vector.load %arg6[%c2_39, %c7_40, %c0_41] : memref<18x25x4xf32, #tpu.memory_space<vmem>>, vector<16x16x4xf32>
    %49 = vector.shape_cast %47 : vector<1x4xf32> to vector<1x1x4xf32>
    %50 = vector.broadcast %49 : vector<1x1x4xf32> to vector<16x16x4xf32>
    %51 = arith.mulf %50, %48 : vector<16x16x4xf32>
    %52 = arith.addf %46, %51 : vector<16x16x4xf32>
    %c7_42 = arith.constant 7 : index
    %c0_43 = arith.constant 0 : index
    %53 = vector.load %arg2[%c7_42, %c0_43] : memref<9x4xf32, #tpu.memory_space<vmem>>, vector<1x4xf32>
    %c2_44 = arith.constant 2 : index
    %c8_45 = arith.constant 8 : index
    %c0_46 = arith.constant 0 : index
    %54 = vector.load %arg6[%c2_44, %c8_45, %c0_46] : memref<18x25x4xf32, #tpu.memory_space<vmem>>, vector<16x16x4xf32>
    %55 = vector.shape_cast %53 : vector<1x4xf32> to vector<1x1x4xf32>
    %56 = vector.broadcast %55 : vector<1x1x4xf32> to vector<16x16x4xf32>
    %57 = arith.mulf %56, %54 : vector<16x16x4xf32>
    %58 = arith.addf %52, %57 : vector<16x16x4xf32>
    %c8_47 = arith.constant 8 : index
    %c0_48 = arith.constant 0 : index
    %59 = vector.load %arg2[%c8_47, %c0_48] : memref<9x4xf32, #tpu.memory_space<vmem>>, vector<1x4xf32>
    %c2_49 = arith.constant 2 : index
    %c9_50 = arith.constant 9 : index
    %c0_51 = arith.constant 0 : index
    %60 = vector.load %arg6[%c2_49, %c9_50, %c0_51] : memref<18x25x4xf32, #tpu.memory_space<vmem>>, vector<16x16x4xf32>
    %61 = vector.shape_cast %59 : vector<1x4xf32> to vector<1x1x4xf32>
    %62 = vector.broadcast %61 : vector<1x1x4xf32> to vector<16x16x4xf32>
    %63 = arith.mulf %62, %60 : vector<16x16x4xf32>
    %64 = arith.addf %58, %63 : vector<16x16x4xf32>
    %c0_52 = arith.constant 0 : index
    %c0_53 = arith.constant 0 : index
    %c0_54 = arith.constant 0 : index
    %c0_55 = arith.constant 0 : index
    %65 = vector.load %arg5[%c0_52, %c0_53, %c0_54, %c0_55] : memref<1x16x16x4xf32, #tpu.memory_space<vmem>>, vector<1x16x16x4xf32>
    %66 = vector.shape_cast %65 : vector<1x16x16x4xf32> to vector<16x16x4xf32>
    %67 = vector.shape_cast %64 : vector<16x16x4xf32> to vector<1x16x16x4xf32>
    tpu.vector_store %arg5[%c0_52, %c0_53, %c0_54, %c0_55], %67 {strides = array<i32>} : memref<1x16x16x4xf32, #tpu.memory_space<vmem>>, vector<1x16x16x4xf32>,
    return
  }
  func.func @transform_0(%arg0: i32, %arg1: i32) -> (i32, i32) {
    %c0_i32 = arith.constant 0 : i32
    %c0_i32_0 = arith.constant 0 : i32
    return %c0_i32, %arg0 : i32, i32
  }
  func.func @transform_1(%arg0: i32, %arg1: i32) -> (i32, i32) {
    %c0_i32 = arith.constant 0 : i32
    %c0_i32_0 = arith.constant 0 : i32
    return %c0_i32, %arg0 : i32, i32
  }
  func.func @transform_2(%arg0: i32, %arg1: i32) -> (i32, i32, i32, i32) {
    %c0_i32 = arith.constant 0 : i32
    %c0_i32_0 = arith.constant 0 : i32
    %c0_i32_1 = arith.constant 0 : i32
    return %arg1, %c0_i32, %c0_i32_0, %arg0 : i32, i32, i32, i32
  }
  func.func @transform_3(%arg0: i32, %arg1: i32) -> (i32, i32, i32, i32) {
    %c0_i32 = arith.constant 0 : i32
    %c0_i32_0 = arith.constant 0 : i32
    %c0_i32_1 = arith.constant 0 : i32
    return %arg1, %c0_i32, %c0_i32_0, %arg0 : i32, i32, i32, i32
  }
}

</mosaic_0001>

<llo_original>
// kernel: tpu_custom_call.1
$region0: #{tpu_custom_call.1}
  #allocation0 [shape = 'u32[]', space=smem, size = 0x4, offset = 0x4, fixed_abs, tag = 'smem constant byte address 0x4 - core index']
  #allocation1 [shape = 'u32[144,128]{1,0:T(1,128)}', space=vmem, size = 0x12000, scoped, tag = 'internal scratch']
  #allocation2 [shape = 'f32[18,25,4]{2,1,0:T(8,128)}', space=vmem, size = 0x48000, scoped, tag = 'scratch operand']
  %s0 = inlined_call_operand.vmem [shape: f32[9,4], index: 0, kind: input, shape index: {}]
  %s1 = inlined_call_operand.vmem [shape: f32[1,4], index: 1, kind: input, shape index: {}]
  %s2 = inlined_call_operand.vmem [shape: f32[2,16,16,4], index: 2, kind: input, shape index: {}]
  %s3 = inlined_call_operand.vmem [shape: f32[2,16,16,4], index: 3, kind: output, shape index: {}]
  %s4 = sld [smem:[#allocation0]]
  $region45: #{tpu_custom_call.1} parent=0
    _
  %s6 = ssub.s32 1, %s4
  %s7 = scalar_select 0, %s6, %s4
  loop: start=0, step=1, limit=4
  $region2: #{tpu_custom_call.1} parent=0 // loop_pre_header
    _
  $region3: #{tpu_custom_call.1} parent=0 // loop_header
    %s9 = sphi 0, %s13
    %p10 = scmp.ge.s32.totalorder %s9, 4
    %s16 = sphi 0, %s28
    %s17 = sphi 0, %s24
    %s18 = sphi 0, %s16
    %s19 = sphi 0, %s17
    %s20 = sphi 0, %s18
    %s21 = sphi 0, %s19
    %s31 = sphi 0, %s33
    %s34 = sphi 0, %s31
    %s35 = sphi 0, %s34
    %s51 = sphi 0, %s35
    %s57 = sphi 0, %s59
    %s60 = sphi 0, %s57
    %s61 = sphi 0, %s60
    %s77 = sphi 0, %s61
    %s85 = sphi 0, %s87
    %s88 = sphi 0, %s85
    %s89 = sphi 0, %s88
    %s105 = sphi 0, %s89
    %s113 = sphi 0, %s115
    %s116 = sphi 0, %s113
    %s117 = sphi 0, %s116
    %s133 = sphi 0, %s117
  $region4: #{tpu_custom_call.1} parent=0 // loop_header_branch
    %12 = sbr.rel (%p10) target = $region8
  $region5: #{tpu_custom_call.1} parent=0 // loop_body
    %s14 = ssub.s32 %s9, 1
    %s15 = ssub.s32 %s9, 2
    %s22 = sadd.s32 1, %s17
    %p23 = scmp.ge.s32.totalorder %s22, 2
    %s24 = scalar_select %p23, 0, %s22
    %s25 = sadd.s32 1, %s16
    %s26 = scalar_select %p23, %s25, %s16
    %p27 = scmp.ge.s32.totalorder %s26, 1
    %s28 = scalar_select %p27, 0, %s26
    %s29 = ssub.s32 %s16, %s28
    %p30 = scmp.eq.s32.totalorder %s29, 0
    %s32 = sadd.s32 %s31, 1
    %s33 = scalar_select %p30, %s31, %s32
    %p36 = pneg %p30
    %p37 = scmp.eq.s32.totalorder %s9, 1
    %p38 = por %p36, %p37
    %p39 = scmp.ne.s32.totalorder %s31, %s34
    %p40 = scmp.eq.s32.totalorder %s9, 0
    %p41 = por %p39, %p40
    %p42 = scmp.ne.s32.totalorder %s31, %s34
    %p43 = scmp.eq.s32.totalorder %s14, 1
    %p44 = por %p42, %p43
    %p45 = scmp.ne.s32.totalorder %s34, %s35
    %p46 = scmp.eq.s32.totalorder %s14, 0
    %p47 = por %p45, %p46
    %p48 = scmp.ne.s32.totalorder %s34, %s35
    %p49 = scmp.eq.s32.totalorder %s15, 1
    %p50 = por %p48, %p49
    %p52 = scmp.ne.s32.totalorder %s35, %s51
    %p53 = scmp.eq.s32.totalorder %s15, 0
    %p54 = por %p52, %p53
    %s55 = ssub.s32 %s16, %s28
    %p56 = scmp.eq.s32.totalorder %s55, 0
    %s58 = sadd.s32 %s57, 1
    %s59 = scalar_select %p56, %s57, %s58
    %p62 = pneg %p56
    %p63 = scmp.eq.s32.totalorder %s9, 1
    %p64 = por %p62, %p63
    %p65 = scmp.ne.s32.totalorder %s57, %s60
    %p66 = scmp.eq.s32.totalorder %s9, 0
    %p67 = por %p65, %p66
    %p68 = scmp.ne.s32.totalorder %s57, %s60
    %p69 = scmp.eq.s32.totalorder %s14, 1
    %p70 = por %p68, %p69
    %p71 = scmp.ne.s32.totalorder %s60, %s61
    %p72 = scmp.eq.s32.totalorder %s14, 0
    %p73 = por %p71, %p72
    %p74 = scmp.ne.s32.totalorder %s60, %s61
    %p75 = scmp.eq.s32.totalorder %s15, 1
    %p76 = por %p74, %p75
    %p78 = scmp.ne.s32.totalorder %s61, %s77
    %p79 = scmp.eq.s32.totalorder %s15, 0
    %p80 = por %p78, %p79
    %s81 = ssub.s32 %s17, %s24
    %s82 = ssub.s32 %s16, %s28
    %s83 = sor.u32 %s81, %s82
    %p84 = scmp.eq.s32.totalorder %s83, 0
    %s86 = sadd.s32 %s85, 1
    %s87 = scalar_select %p84, %s85, %s86
    %p90 = pneg %p84
    %p91 = scmp.eq.s32.totalorder %s9, 1
    %p92 = por %p90, %p91
    %p93 = scmp.ne.s32.totalorder %s85, %s88
    %p94 = scmp.eq.s32.totalorder %s9, 0
    %p95 = por %p93, %p94
    %p96 = scmp.ne.s32.totalorder %s85, %s88
    %p97 = scmp.eq.s32.totalorder %s14, 1
    %p98 = por %p96, %p97
    %p99 = scmp.ne.s32.totalorder %s88, %s89
    %p100 = scmp.eq.s32.totalorder %s14, 0
    %p101 = por %p99, %p100
    %p102 = scmp.ne.s32.totalorder %s88, %s89
    %p103 = scmp.eq.s32.totalorder %s15, 1
    %p104 = por %p102, %p103
    %p106 = scmp.ne.s32.totalorder %s89, %s105
    %p107 = scmp.eq.s32.totalorder %s15, 0
    %p108 = por %p106, %p107
    %s109 = ssub.s32 %s17, %s24
    %s110 = ssub.s32 %s16, %s28
    %s111 = sor.u32 %s109, %s110
    %p112 = scmp.eq.s32.totalorder %s111, 0
    %s114 = sadd.s32 %s113, 1
    %s115 = scalar_select %p112, %s113, %s114
    %p118 = pneg %p112
    %p119 = scmp.eq.s32.totalorder %s9, 1
    %p120 = por %p118, %p119
    %p121 = scmp.ne.s32.totalorder %s113, %s116
    %p122 = scmp.eq.s32.totalorder %s9, 0
    %p123 = por %p121, %p122
    %p124 = scmp.ne.s32.totalorder %s113, %s116
    %p125 = scmp.eq.s32.totalorder %s14, 1
    %p126 = por %p124, %p125
    %p127 = scmp.ne.s32.totalorder %s116, %s117
    %p128 = scmp.eq.s32.totalorder %s14, 0
    %p129 = por %p127, %p128
    %p130 = scmp.ne.s32.totalorder %s116, %s117
    %p131 = scmp.eq.s32.totalorder %s15, 1
    %p132 = por %p130, %p131
    %p134 = scmp.ne.s32.totalorder %s117, %s133
    %p135 = scmp.eq.s32.totalorder %s15, 0
    %p136 = por %p134, %p135
    %p137 = scmp.le.s32.totalorder 1, %s9
    %p138 = scmp.lt.s32.totalorder %s9, 3
    %p139 = pnand %p137, %p138
    %p140 = pneg %p139
    // Predicated region
    $region9: #{tpu_custom_call.1} parent=5 // pred_check
      _
    $region10: #{tpu_custom_call.1} parent=5 // pred_check_branch
      %142 = sbr.rel (%p139) target = $region12
    $region11: #{tpu_custom_call.1} parent=5 // pred_region
      %s143 = ssub.s32 %s9, 1
      // Predicated region
      $region13: #{tpu_custom_call.1} parent=11 // pred_check
        %p144 = pneg %p47
      $region14: #{tpu_custom_call.1} parent=11 // pred_check_branch
        %146 = sbr.rel (%p144) target = $region16
      $region15: #{tpu_custom_call.1} parent=11 // pred_region
        %p147 = scmp.lt.s32.totalorder %s18, 0
        %s148 = scalar_select %p147, %s18, 0
        %s149 = smul.addr %s148, 8
        %s150 = scalar_lea.vmem %s0, %s149
      $region16: #{tpu_custom_call.1} parent=11 // pred_fallthru
        _
      // Predicated region
      $region17: #{tpu_custom_call.1} parent=11 // pred_check
        %p151 = pneg %p73
      $region18: #{tpu_custom_call.1} parent=11 // pred_check_branch
        %153 = sbr.rel (%p151) target = $region20
      $region19: #{tpu_custom_call.1} parent=11 // pred_region
        %p154 = scmp.lt.s32.totalorder %s18, 0
        %s155 = scalar_select %p154, %s18, 0
        %s156 = scalar_lea.vmem %s1, %s155
      $region20: #{tpu_custom_call.1} parent=11 // pred_fallthru
        _
    $region12: #{tpu_custom_call.1} parent=5 // pred_fallthru
      _
    %p157 = scmp.lt.s32.totalorder %s9, 2
    // Predicated region
    $region21: #{tpu_custom_call.1} parent=5 // pred_check
      %p158 = pneg %p157
    $region22: #{tpu_custom_call.1} parent=5 // pred_check_branch
      %160 = sbr.rel (%p158) target = $region24
    $region23: #{tpu_custom_call.1} parent=5 // pred_region
      // Predicated region
      $region25: #{tpu_custom_call.1} parent=23 // pred_check
        %p161 = pneg %p95
      $region26: #{tpu_custom_call.1} parent=23 // pred_check_branch
        %163 = sbr.rel (%p161) target = $region28
      $region27: #{tpu_custom_call.1} parent=23 // pred_region
        %p164 = scmp.lt.s32.totalorder %s17, 1
        %s165 = scalar_select %p164, %s17, 1
        %p166 = scmp.lt.s32.totalorder %s16, 0
        %s167 = scalar_select %p166, %s16, 0
        %s168 = smul.addr %s165, 32
        %s169 = sadd.s32 %s167, %s168
        %s170 = smul.addr %s169, 8
        %s171 = scalar_lea.vmem %s2, %s170
      $region28: #{tpu_custom_call.1} parent=23 // pred_fallthru
        _
    $region24: #{tpu_custom_call.1} parent=5 // pred_fallthru
      _
    %p172 = scmp.le.s32.totalorder 1, %s9
    %p173 = scmp.lt.s32.totalorder %s9, 3
    %p174 = pnand %p172, %p173
    %p175 = pneg %p174
    // Predicated region
    $region29: #{tpu_custom_call.1} parent=5 // pred_check
      _
    $region30: #{tpu_custom_call.1} parent=5 // pred_check_branch
      %177 = sbr.rel (%p174) target = $region32
    $region31: #{tpu_custom_call.1} parent=5 // pred_region
      %s178 = ssub.s32 %s9, 1
      %p179 = scmp.lt.s32.totalorder %s18, 0
      %s180 = scalar_select %p179, %s18, 0
      %s181 = smul.addr %s180, 8
      %s182 = scalar_lea.vmem %s0, %s181
      %p183 = pneg %p47
      %p184 = pneg %p44
      %p185 = scmp.lt.s32.totalorder %s18, 0
      %s186 = scalar_select %p185, %s18, 0
      %s187 = scalar_lea.vmem %s1, %s186
      %p188 = pneg %p73
      %p189 = pneg %p70
      %p190 = scmp.lt.s32.totalorder %s19, 1
      %s191 = scalar_select %p190, %s19, 1
      %p192 = scmp.lt.s32.totalorder %s18, 0
      %s193 = scalar_select %p192, %s18, 0
      %s194 = smul.addr %s191, 32
      %s195 = sadd.s32 %s193, %s194
      %s196 = smul.addr %s195, 8
      %s197 = scalar_lea.vmem %s2, %s196
      %p198 = pneg %p101
      %p199 = pneg %p98
      %p200 = pneg %p129
      %p201 = pneg %p126
      %p202 = scmp.lt.s32.totalorder %s19, 1
      %s203 = scalar_select %p202, %s19, 1
      %p204 = scmp.lt.s32.totalorder %s18, 0
      %s205 = scalar_select %p204, %s18, 0
      %s206 = smul.addr %s203, 32
      %s207 = sadd.s32 %s205, %s206
      %s208 = smul.addr %s207, 8
      %s209 = scalar_lea.vmem %s3, %s208
      %p210 = scmp.lt.s32.totalorder %s18, 0
      %s211 = scalar_select %p210, %s18, 0
      %s212 = smul.addr %s211, 8
      %s213 = scalar_lea.vmem %s0, %s212
      %p214 = scmp.lt.s32.totalorder %s18, 0
      %s215 = scalar_select %p214, %s18, 0
      %s216 = scalar_lea.vmem %s1, %s215
      %p217 = scmp.lt.s32.totalorder %s19, 1
      %s218 = scalar_select %p217, %s19, 1
      %p219 = scmp.lt.s32.totalorder %s18, 0
      %s220 = scalar_select %p219, %s18, 0
      %s221 = smul.addr %s218, 32
      %s222 = sadd.s32 %s220, %s221
      %s223 = smul.addr %s222, 8
      %s224 = scalar_lea.vmem %s2, %s223
      %p225 = scmp.lt.s32.totalorder %s19, 1
      %s226 = scalar_select %p225, %s19, 1
      %p227 = scmp.lt.s32.totalorder %s18, 0
      %s228 = scalar_select %p227, %s18, 0
      %s229 = smul.addr %s226, 32
      %s230 = sadd.s32 %s228, %s229
      %s231 = smul.addr %s230, 8
      %s232 = scalar_lea.vmem %s3, %s231
      %v233 = vld [vmem:[%s224] sm:$0xff]
      %v234 = vld [vmem:[%s224 + $0x8] sm:$0xff]
      %v235 = vld [vmem:[%s224 + $0x10] sm:$0xff]
      %v236 = vld [vmem:[%s224 + $0x18] sm:$0xff]
      %v237 = vld [vmem:[%s224 + $0x20] sm:$0xff]
      %v238 = vld [vmem:[%s224 + $0x28] sm:$0xff]
      %v239 = vld [vmem:[%s224 + $0x30] sm:$0xff]
      %v240 = vld [vmem:[%s224 + $0x38] sm:$0xff]
      %v241 = vld [vmem:[%s224 + $0x40] sm:$0xff]
      %v242 = vld [vmem:[%s224 + $0x48] sm:$0xff]
      %v243 = vld [vmem:[%s224 + $0x50] sm:$0xff]
      %v244 = vld [vmem:[%s224 + $0x58] sm:$0xff]
      %v245 = vld [vmem:[%s224 + $0x60] sm:$0xff]
      %v246 = vld [vmem:[%s224 + $0x68] sm:$0xff]
      %v247 = vld [vmem:[%s224 + $0x70] sm:$0xff]
      %v248 = vld [vmem:[%s224 + $0x78] sm:$0xff]
      %v249 = vld [vmem:[%s224 + $0x80] sm:$0xff]
      %v250 = vld [vmem:[%s224 + $0x88] sm:$0xff]
      %v251 = vld [vmem:[%s224 + $0x90] sm:$0xff]
      %v252 = vld [vmem:[%s224 + $0x98] sm:$0xff]
      %v253 = vld [vmem:[%s224 + $0xa0] sm:$0xff]
      %v254 = vld [vmem:[%s224 + $0xa8] sm:$0xff]
      %v255 = vld [vmem:[%s224 + $0xb0] sm:$0xff]
      %v256 = vld [vmem:[%s224 + $0xb8] sm:$0xff]
      %v257 = vld [vmem:[%s224 + $0xc0] sm:$0xff]
      %v258 = vld [vmem:[%s224 + $0xc8] sm:$0xff]
      %v259 = vld [vmem:[%s224 + $0xd0] sm:$0xff]
      %v260 = vld [vmem:[%s224 + $0xd8] sm:$0xff]
      %v261 = vld [vmem:[%s224 + $0xe0] sm:$0xff]
      %v262 = vld [vmem:[%s224 + $0xe8] sm:$0xff]
      %v263 = vld [vmem:[%s224 + $0xf0] sm:$0xff]
      %v264 = vld [vmem:[%s224 + $0xf8] sm:$0xff]
      %vm265 = vcmask 31744
      %266 = vst.msk [vmem:[#allocation2] sm:$0xff] %vm265, 0.0
      %267 = vst.msk [vmem:[#allocation2 + $0x8] sm:$0xff] %vm265, 0.0
      %268 = vst.msk [vmem:[#allocation2 + $0x10] sm:$0xff] %vm265, 0.0
      %vm269 = vcmask 24576
      %270 = vst.msk [vmem:[#allocation2 + $0x18] sm:$0x1] %vm269, 0.0
      %s271 = scalar_lea.vmem [#allocation2], 544
      %272 = vst.msk [vmem:[%s271] sm:$0xff] %vm265, 0.0
      %273 = vst.msk [vmem:[%s271 + $0x8] sm:$0xff] %vm265, 0.0
      %274 = vst.msk [vmem:[%s271 + $0x10] sm:$0xff] %vm265, 0.0
      %275 = vst.msk [vmem:[%s271 + $0x18] sm:$0x1] %vm269, 0.0
      %s276 = scalar_lea.vmem [#allocation2], 32
      %277 = vst.msk [vmem:[%s276 + $0x7] sm:$0x1] %vm269, 0.0
      %278 = vst.msk [vmem:[%s276 + $0x27] sm:$0x1] %vm269, 0.0
      %279 = vst.msk [vmem:[%s276 + $0x47] sm:$0x1] %vm269, 0.0
      %280 = vst.msk [vmem:[%s276 + $0x67] sm:$0x1] %vm269, 0.0
      %281 = vst.msk [vmem:[%s276 + $0x87] sm:$0x1] %vm269, 0.0
      %282 = vst.msk [vmem:[%s276 + $0xa7] sm:$0x1] %vm269, 0.0
      %283 = vst.msk [vmem:[%s276 + $0xc7] sm:$0x1] %vm269, 0.0
      %284 = vst.msk [vmem:[%s276 + $0xe7] sm:$0x1] %vm269, 0.0
      %285 = vst.msk [vmem:[%s276 + $0x107] sm:$0x1] %vm269, 0.0
      %286 = vst.msk [vmem:[%s276 + $0x127] sm:$0x1] %vm269, 0.0
      %287 = vst.msk [vmem:[%s276 + $0x147] sm:$0x1] %vm269, 0.0
      %288 = vst.msk [vmem:[%s276 + $0x167] sm:$0x1] %vm269, 0.0
      %289 = vst.msk [vmem:[%s276 + $0x187] sm:$0x1] %vm269, 0.0
      %290 = vst.msk [vmem:[%s276 + $0x1a7] sm:$0x1] %vm269, 0.0
      %291 = vst.msk [vmem:[%s276 + $0x1c7] sm:$0x1] %vm269, 0.0
      %292 = vst.msk [vmem:[%s276 + $0x1e7] sm:$0x1] %vm269, 0.0
      %293 = vst.msk [vmem:[%s276 + $0x18] sm:$0x1] %vm269, 0.0
      %294 = vst.msk [vmem:[%s276 + $0x38] sm:$0x1] %vm269, 0.0
      %295 = vst.msk [vmem:[%s276 + $0x58] sm:$0x1] %vm269, 0.0
      %296 = vst.msk [vmem:[%s276 + $0x78] sm:$0x1] %vm269, 0.0
      %297 = vst.msk [vmem:[%s276 + $0x98] sm:$0x1] %vm269, 0.0
      %298 = vst.msk [vmem:[%s276 + $0xb8] sm:$0x1] %vm269, 0.0
      %299 = vst.msk [vmem:[%s276 + $0xd8] sm:$0x1] %vm269, 0.0
      %300 = vst.msk [vmem:[%s276 + $0xf8] sm:$0x1] %vm269, 0.0
      %301 = vst.msk [vmem:[%s276 + $0x118] sm:$0x1] %vm269, 0.0
      %302 = vst.msk [vmem:[%s276 + $0x138] sm:$0x1] %vm269, 0.0
      %303 = vst.msk [vmem:[%s276 + $0x158] sm:$0x1] %vm269, 0.0
      %304 = vst.msk [vmem:[%s276 + $0x178] sm:$0x1] %vm269, 0.0
      %305 = vst.msk [vmem:[%s276 + $0x198] sm:$0x1] %vm269, 0.0
      %306 = vst.msk [vmem:[%s276 + $0x1b8] sm:$0x1] %vm269, 0.0
      %307 = vst.msk [vmem:[%s276 + $0x1d8] sm:$0x1] %vm269, 0.0
      %308 = vst.msk [vmem:[%s276 + $0x1f8] sm:$0x1] %vm269, 0.0
      %309 = vst.msk [vmem:[%s276 + $0x8] sm:$0xff] %vm265, %v233
      %310 = vst.msk [vmem:[%s276 + $0x10] sm:$0xff] %vm265, %v234
      %311 = vst.msk [vmem:[%s276 + $0x28] sm:$0xff] %vm265, %v235
      %312 = vst.msk [vmem:[%s276 + $0x30] sm:$0xff] %vm265, %v236
      %313 = vst.msk [vmem:[%s276 + $0x48] sm:$0xff] %vm265, %v237
      %314 = vst.msk [vmem:[%s276 + $0x50] sm:$0xff] %vm265, %v238
      %315 = vst.msk [vmem:[%s276 + $0x68] sm:$0xff] %vm265, %v239
      %316 = vst.msk [vmem:[%s276 + $0x70] sm:$0xff] %vm265, %v240
      %317 = vst.msk [vmem:[%s276 + $0x88] sm:$0xff] %vm265, %v241
      %318 = vst.msk [vmem:[%s276 + $0x90] sm:$0xff] %vm265, %v242
      %319 = vst.msk [vmem:[%s276 + $0xa8] sm:$0xff] %vm265, %v243
      %320 = vst.msk [vmem:[%s276 + $0xb0] sm:$0xff] %vm265, %v244
      %321 = vst.msk [vmem:[%s276 + $0xc8] sm:$0xff] %vm265, %v245
      %322 = vst.msk [vmem:[%s276 + $0xd0] sm:$0xff] %vm265, %v246
      %323 = vst.msk [vmem:[%s276 + $0xe8] sm:$0xff] %vm265, %v247
      %324 = vst.msk [vmem:[%s276 + $0xf0] sm:$0xff] %vm265, %v248
      %325 = vst.msk [vmem:[%s276 + $0x108] sm:$0xff] %vm265, %v249
      %326 = vst.msk [vmem:[%s276 + $0x110] sm:$0xff] %vm265, %v250
      %327 = vst.msk [vmem:[%s276 + $0x128] sm:$0xff] %vm265, %v251
      %328 = vst.msk [vmem:[%s276 + $0x130] sm:$0xff] %vm265, %v252
      %329 = vst.msk [vmem:[%s276 + $0x148] sm:$0xff] %vm265, %v253
      %330 = vst.msk [vmem:[%s276 + $0x150] sm:$0xff] %vm265, %v254
      %331 = vst.msk [vmem:[%s276 + $0x168] sm:$0xff] %vm265, %v255
      %332 = vst.msk [vmem:[%s276 + $0x170] sm:$0xff] %vm265, %v256
      %333 = vst.msk [vmem:[%s276 + $0x188] sm:$0xff] %vm265, %v257
      %334 = vst.msk [vmem:[%s276 + $0x190] sm:$0xff] %vm265, %v258
      %335 = vst.msk [vmem:[%s276 + $0x1a8] sm:$0xff] %vm265, %v259
      %336 = vst.msk [vmem:[%s276 + $0x1b0] sm:$0xff] %vm265, %v260
      %337 = vst.msk [vmem:[%s276 + $0x1c8] sm:$0xff] %vm265, %v261
      %338 = vst.msk [vmem:[%s276 + $0x1d0] sm:$0xff] %vm265, %v262
      %339 = vst.msk [vmem:[%s276 + $0x1e8] sm:$0xff] %vm265, %v263
      %340 = vst.msk [vmem:[%s276 + $0x1f0] sm:$0xff] %vm265, %v264
      %v341 = vld [vmem:[%s213 + $0x4] sm:$0x1]
      %v342 = vlaneseq
      %v343 = vshrl.u32 %v342, 7
      %v344 = vsub.s32 0, %v343
      %v345 = vrot.slane %v341, %v344
      %v346 = vmul.f32 %v345, %v233
      %v347 = vmul.f32 %v345, %v234
      %v348 = vmul.f32 %v345, %v235
      %v349 = vmul.f32 %v345, %v236
      %v350 = vmul.f32 %v345, %v237
      %v351 = vmul.f32 %v345, %v238
      %v352 = vmul.f32 %v345, %v239
      %v353 = vmul.f32 %v345, %v240
      %v354 = vmul.f32 %v345, %v241
      %v355 = vmul.f32 %v345, %v242
      %v356 = vmul.f32 %v345, %v243
      %v357 = vmul.f32 %v345, %v244
      %v358 = vmul.f32 %v345, %v245
      %v359 = vmul.f32 %v345, %v246
      %v360 = vmul.f32 %v345, %v247
      %v361 = vmul.f32 %v345, %v248
      %v362 = vmul.f32 %v345, %v249
      %v363 = vmul.f32 %v345, %v250
      %v364 = vmul.f32 %v345, %v251
      %v365 = vmul.f32 %v345, %v252
      %v366 = vmul.f32 %v345, %v253
      %v367 = vmul.f32 %v345, %v254
      %v368 = vmul.f32 %v345, %v255
      %v369 = vmul.f32 %v345, %v256
      %v370 = vmul.f32 %v345, %v257
      %v371 = vmul.f32 %v345, %v258
      %v372 = vmul.f32 %v345, %v259
      %v373 = vmul.f32 %v345, %v260
      %v374 = vmul.f32 %v345, %v261
      %v375 = vmul.f32 %v345, %v262
      %v376 = vmul.f32 %v345, %v263
      %v377 = vmul.f32 %v345, %v264
      %v378 = vld [vmem:[%s216] sm:$0x1]
      %v380 = vlaneseq
      %v381 = vshrl.u32 %v380, 7
      %v382 = vsub.s32 0, %v381
      %v383 = vrot.slane %v378, %v382
      %v385 = vadd.f32 %v346, %v383
      %v386 = vadd.f32 %v347, %v383
      %v387 = vadd.f32 %v348, %v383
      %v388 = vadd.f32 %v349, %v383
      %v389 = vadd.f32 %v350, %v383
      %v390 = vadd.f32 %v351, %v383
      %v391 = vadd.f32 %v352, %v383
      %v392 = vadd.f32 %v353, %v383
      %v393 = vadd.f32 %v354, %v383
      %v394 = vadd.f32 %v355, %v383
      %v395 = vadd.f32 %v356, %v383
      %v396 = vadd.f32 %v357, %v383
      %v397 = vadd.f32 %v358, %v383
      %v398 = vadd.f32 %v359, %v383
      %v399 = vadd.f32 %v360, %v383
      %v400 = vadd.f32 %v361, %v383
      %v401 = vadd.f32 %v362, %v383
      %v402 = vadd.f32 %v363, %v383
      %v403 = vadd.f32 %v364, %v383
      %v404 = vadd.f32 %v365, %v383
      %v405 = vadd.f32 %v366, %v383
      %v406 = vadd.f32 %v367, %v383
      %v407 = vadd.f32 %v368, %v383
      %v408 = vadd.f32 %v369, %v383
      %v409 = vadd.f32 %v370, %v383
      %v410 = vadd.f32 %v371, %v383
      %v411 = vadd.f32 %v372, %v383
      %v412 = vadd.f32 %v373, %v383
      %v413 = vadd.f32 %v374, %v383
      %v414 = vadd.f32 %v375, %v383
      %v415 = vadd.f32 %v376, %v383
      %v416 = vadd.f32 %v377, %v383
      %v417 = vld [vmem:[%s213] sm:$0x1]
      %v418 = vld [vmem:[#allocation2 + $0x7] sm:$0xff]
      %v419 = vld [vmem:[#allocation2 + $0xf] sm:$0xff]
      %v420 = vld [vmem:[#allocation2 + $0x27] sm:$0xff]
      %v421 = vld [vmem:[#allocation2 + $0x2f] sm:$0xff]
      %v422 = vld [vmem:[#allocation2 + $0x47] sm:$0xff]
      %v423 = vld [vmem:[#allocation2 + $0x4f] sm:$0xff]
      %v424 = vld [vmem:[#allocation2 + $0x67] sm:$0xff]
      %v425 = vld [vmem:[#allocation2 + $0x6f] sm:$0xff]
      %v426 = vld [vmem:[#allocation2 + $0x87] sm:$0xff]
      %v427 = vld [vmem:[#allocation2 + $0x8f] sm:$0xff]
      %v428 = vld [vmem:[#allocation2 + $0xa7] sm:$0xff]
      %v429 = vld [vmem:[#allocation2 + $0xaf] sm:$0xff]
      %v430 = vld [vmem:[#allocation2 + $0xc7] sm:$0xff]
      %v431 = vld [vmem:[#allocation2 + $0xcf] sm:$0xff]
      %v432 = vld [vmem:[#allocation2 + $0xe7] sm:$0xff]
      %v433 = vld [vmem:[#allocation2 + $0xef] sm:$0xff]
      %v434 = vld [vmem:[#allocation2 + $0x107] sm:$0xff]
      %v435 = vld [vmem:[#allocation2 + $0x10f] sm:$0xff]
      %v436 = vld [vmem:[#allocation2 + $0x127] sm:$0xff]
      %v437 = vld [vmem:[#allocation2 + $0x12f] sm:$0xff]
      %v438 = vld [vmem:[#allocation2 + $0x147] sm:$0xff]
      %v439 = vld [vmem:[#allocation2 + $0x14f] sm:$0xff]
      %v440 = vld [vmem:[#allocation2 + $0x167] sm:$0xff]
      %v441 = vld [vmem:[#allocation2 + $0x16f] sm:$0xff]
      %v442 = vld [vmem:[#allocation2 + $0x187] sm:$0xff]
      %v443 = vld [vmem:[#allocation2 + $0x18f] sm:$0xff]
      %v444 = vld [vmem:[#allocation2 + $0x1a7] sm:$0xff]
      %v445 = vld [vmem:[#allocation2 + $0x1af] sm:$0xff]
      %v446 = vld [vmem:[#allocation2 + $0x1c7] sm:$0xff]
      %v447 = vld [vmem:[#allocation2 + $0x1cf] sm:$0xff]
      %v448 = vld [vmem:[#allocation2 + $0x1e7] sm:$0xff]
      %v449 = vld [vmem:[#allocation2 + $0x1ef] sm:$0xff]
      %v450 = vlaneseq
      %v451 = vshrl.u32 %v450, 7
      %v452 = vsub.s32 0, %v451
      %v453 = vrot.slane %v417, %v452
      %v454 = vmul.f32 %v453, %v418
      %v455 = vmul.f32 %v453, %v419
      %v456 = vmul.f32 %v453, %v420
      %v457 = vmul.f32 %v453, %v421
      %v458 = vmul.f32 %v453, %v422
      %v459 = vmul.f32 %v453, %v423
      %v460 = vmul.f32 %v453, %v424
      %v461 = vmul.f32 %v453, %v425
      %v462 = vmul.f32 %v453, %v426
      %v463 = vmul.f32 %v453, %v427
      %v464 = vmul.f32 %v453, %v428
      %v465 = vmul.f32 %v453, %v429
      %v466 = vmul.f32 %v453, %v430
      %v467 = vmul.f32 %v453, %v431
      %v468 = vmul.f32 %v453, %v432
      %v469 = vmul.f32 %v453, %v433
      %v470 = vmul.f32 %v453, %v434
      %v471 = vmul.f32 %v453, %v435
      %v472 = vmul.f32 %v453, %v436
      %v473 = vmul.f32 %v453, %v437
      %v474 = vmul.f32 %v453, %v438
      %v475 = vmul.f32 %v453, %v439
      %v476 = vmul.f32 %v453, %v440
      %v477 = vmul.f32 %v453, %v441
      %v478 = vmul.f32 %v453, %v442
      %v479 = vmul.f32 %v453, %v443
      %v480 = vmul.f32 %v453, %v444
      %v481 = vmul.f32 %v453, %v445
      %v482 = vmul.f32 %v453, %v446
      %v483 = vmul.f32 %v453, %v447
      %v484 = vmul.f32 %v453, %v448
      %v485 = vmul.f32 %v453, %v449
      %v486 = vadd.f32 %v385, %v454
      %v487 = vadd.f32 %v386, %v455
      %v488 = vadd.f32 %v387, %v456
      %v489 = vadd.f32 %v388, %v457
      %v490 = vadd.f32 %v389, %v458
      %v491 = vadd.f32 %v390, %v459
      %v492 = vadd.f32 %v391, %v460
      %v493 = vadd.f32 %v392, %v461
      %v494 = vadd.f32 %v393, %v462
      %v495 = vadd.f32 %v394, %v463
      %v496 = vadd.f32 %v395, %v464
      %v497 = vadd.f32 %v396, %v465
      %v498 = vadd.f32 %v397, %v466
      %v499 = vadd.f32 %v398, %v467
      %v500 = vadd.f32 %v399, %v468
      %v501 = vadd.f32 %v400, %v469
      %v502 = vadd.f32 %v401, %v470
      %v503 = vadd.f32 %v402, %v471
      %v504 = vadd.f32 %v403, %v472
      %v505 = vadd.f32 %v404, %v473
      %v506 = vadd.f32 %v405, %v474
      %v507 = vadd.f32 %v406, %v475
      %v508 = vadd.f32 %v407, %v476
      %v509 = vadd.f32 %v408, %v477
      %v510 = vadd.f32 %v409, %v478
      %v511 = vadd.f32 %v410, %v479
      %v512 = vadd.f32 %v411, %v480
      %v513 = vadd.f32 %v412, %v481
      %v514 = vadd.f32 %v413, %v482
      %v515 = vadd.f32 %v414, %v483
      %v516 = vadd.f32 %v415, %v484
      %v517 = vadd.f32 %v416, %v485
      %v518 = vld [vmem:[%s213 + $0x1] sm:$0x1]
      %v519 = vld [vmem:[#allocation2 + $0x8] sm:$0xff]
      %v520 = vld [vmem:[#allocation2 + $0x10] sm:$0xff]
      %v521 = vld [vmem:[#allocation2 + $0x28] sm:$0xff]
      %v522 = vld [vmem:[#allocation2 + $0x30] sm:$0xff]
      %v523 = vld [vmem:[#allocation2 + $0x48] sm:$0xff]
      %v524 = vld [vmem:[#allocation2 + $0x50] sm:$0xff]
      %v525 = vld [vmem:[#allocation2 + $0x68] sm:$0xff]
      %v526 = vld [vmem:[#allocation2 + $0x70] sm:$0xff]
      %v527 = vld [vmem:[#allocation2 + $0x88] sm:$0xff]
      %v528 = vld [vmem:[#allocation2 + $0x90] sm:$0xff]
      %v529 = vld [vmem:[#allocation2 + $0xa8] sm:$0xff]
      %v530 = vld [vmem:[#allocation2 + $0xb0] sm:$0xff]
      %v531 = vld [vmem:[#allocation2 + $0xc8] sm:$0xff]
      %v532 = vld [vmem:[#allocation2 + $0xd0] sm:$0xff]
      %v533 = vld [vmem:[#allocation2 + $0xe8] sm:$0xff]
      %v534 = vld [vmem:[#allocation2 + $0xf0] sm:$0xff]
      %v535 = vld [vmem:[#allocation2 + $0x108] sm:$0xff]
      %v536 = vld [vmem:[#allocation2 + $0x110] sm:$0xff]
      %v537 = vld [vmem:[#allocation2 + $0x128] sm:$0xff]
      %v538 = vld [vmem:[#allocation2 + $0x130] sm:$0xff]
      %v539 = vld [vmem:[#allocation2 + $0x148] sm:$0xff]
      %v540 = vld [vmem:[#allocation2 + $0x150] sm:$0xff]
      %v541 = vld [vmem:[#allocation2 + $0x168] sm:$0xff]
      %v542 = vld [vmem:[#allocation2 + $0x170] sm:$0xff]
      %v543 = vld [vmem:[#allocation2 + $0x188] sm:$0xff]
      %v544 = vld [vmem:[#allocation2 + $0x190] sm:$0xff]
      %v545 = vld [vmem:[#allocation2 + $0x1a8] sm:$0xff]
      %v546 = vld [vmem:[#allocation2 + $0x1b0] sm:$0xff]
      %v547 = vld [vmem:[#allocation2 + $0x1c8] sm:$0xff]
      %v548 = vld [vmem:[#allocation2 + $0x1d0] sm:$0xff]
      %v549 = vld [vmem:[#allocation2 + $0x1e8] sm:$0xff]
      %v550 = vld [vmem:[#allocation2 + $0x1f0] sm:$0xff]
      %v551 = vlaneseq
      %v552 = vshrl.u32 %v551, 7
      %v553 = vsub.s32 0, %v552
      %v554 = vrot.slane %v518, %v553
      %v555 = vmul.f32 %v554, %v519
      %v556 = vmul.f32 %v554, %v520
      %v557 = vmul.f32 %v554, %v521
      %v558 = vmul.f32 %v554, %v522
      %v559 = vmul.f32 %v554, %v523
      %v560 = vmul.f32 %v554, %v524
      %v561 = vmul.f32 %v554, %v525
      %v562 = vmul.f32 %v554, %v526
      %v563 = vmul.f32 %v554, %v527
      %v564 = vmul.f32 %v554, %v528
      %v565 = vmul.f32 %v554, %v529
      %v566 = vmul.f32 %v554, %v530
      %v567 = vmul.f32 %v554, %v531
      %v568 = vmul.f32 %v554, %v532
      %v569 = vmul.f32 %v554, %v533
      %v570 = vmul.f32 %v554, %v534
      %v571 = vmul.f32 %v554, %v535
      %v572 = vmul.f32 %v554, %v536
      %v573 = vmul.f32 %v554, %v537
      %v574 = vmul.f32 %v554, %v538
      %v575 = vmul.f32 %v554, %v539
      %v576 = vmul.f32 %v554, %v540
      %v577 = vmul.f32 %v554, %v541
      %v578 = vmul.f32 %v554, %v542
      %v579 = vmul.f32 %v554, %v543
      %v580 = vmul.f32 %v554, %v544
      %v581 = vmul.f32 %v554, %v545
      %v582 = vmul.f32 %v554, %v546
      %v583 = vmul.f32 %v554, %v547
      %v584 = vmul.f32 %v554, %v548
      %v585 = vmul.f32 %v554, %v549
      %v586 = vmul.f32 %v554, %v550
      %v587 = vadd.f32 %v486, %v555
      %v588 = vadd.f32 %v487, %v556
      %v589 = vadd.f32 %v488, %v557
      %v590 = vadd.f32 %v489, %v558
      %v591 = vadd.f32 %v490, %v559
      %v592 = vadd.f32 %v491, %v560
      %v593 = vadd.f32 %v492, %v561
      %v594 = vadd.f32 %v493, %v562
      %v595 = vadd.f32 %v494, %v563
      %v596 = vadd.f32 %v495, %v564
      %v597 = vadd.f32 %v496, %v565
      %v598 = vadd.f32 %v497, %v566
      %v599 = vadd.f32 %v498, %v567
      %v600 = vadd.f32 %v499, %v568
      %v601 = vadd.f32 %v500, %v569
      %v602 = vadd.f32 %v501, %v570
      %v603 = vadd.f32 %v502, %v571
      %v604 = vadd.f32 %v503, %v572
      %v605 = vadd.f32 %v504, %v573
      %v606 = vadd.f32 %v505, %v574
      %v607 = vadd.f32 %v506, %v575
      %v608 = vadd.f32 %v507, %v576
      %v609 = vadd.f32 %v508, %v577
      %v610 = vadd.f32 %v509, %v578
      %v611 = vadd.f32 %v510, %v579
      %v612 = vadd.f32 %v511, %v580
      %v613 = vadd.f32 %v512, %v581
      %v614 = vadd.f32 %v513, %v582
      %v615 = vadd.f32 %v514, %v583
      %v616 = vadd.f32 %v515, %v584
      %v617 = vadd.f32 %v516, %v585
      %v618 = vadd.f32 %v517, %v586
      %v619 = vld [vmem:[%s213 + $0x2] sm:$0x1]
      %v620 = vld [vmem:[#allocation2 + $0x9] sm:$0xff]
      %v621 = vld [vmem:[#allocation2 + $0x11] sm:$0xff]
      %v622 = vld [vmem:[#allocation2 + $0x29] sm:$0xff]
      %v623 = vld [vmem:[#allocation2 + $0x31] sm:$0xff]
      %v624 = vld [vmem:[#allocation2 + $0x49] sm:$0xff]
      %v625 = vld [vmem:[#allocation2 + $0x51] sm:$0xff]
      %v626 = vld [vmem:[#allocation2 + $0x69] sm:$0xff]
      %v627 = vld [vmem:[#allocation2 + $0x71] sm:$0xff]
      %v628 = vld [vmem:[#allocation2 + $0x89] sm:$0xff]
      %v629 = vld [vmem:[#allocation2 + $0x91] sm:$0xff]
      %v630 = vld [vmem:[#allocation2 + $0xa9] sm:$0xff]
      %v631 = vld [vmem:[#allocation2 + $0xb1] sm:$0xff]
      %v632 = vld [vmem:[#allocation2 + $0xc9] sm:$0xff]
      %v633 = vld [vmem:[#allocation2 + $0xd1] sm:$0xff]
      %v634 = vld [vmem:[#allocation2 + $0xe9] sm:$0xff]
      %v635 = vld [vmem:[#allocation2 + $0xf1] sm:$0xff]
      %v636 = vld [vmem:[#allocation2 + $0x109] sm:$0xff]
      %v637 = vld [vmem:[#allocation2 + $0x111] sm:$0xff]
      %v638 = vld [vmem:[#allocation2 + $0x129] sm:$0xff]
      %v639 = vld [vmem:[#allocation2 + $0x131] sm:$0xff]
      %v640 = vld [vmem:[#allocation2 + $0x149] sm:$0xff]
      %v641 = vld [vmem:[#allocation2 + $0x151] sm:$0xff]
      %v642 = vld [vmem:[#allocation2 + $0x169] sm:$0xff]
      %v643 = vld [vmem:[#allocation2 + $0x171] sm:$0xff]
      %v644 = vld [vmem:[#allocation2 + $0x189] sm:$0xff]
      %v645 = vld [vmem:[#allocation2 + $0x191] sm:$0xff]
      %v646 = vld [vmem:[#allocation2 + $0x1a9] sm:$0xff]
      %v647 = vld [vmem:[#allocation2 + $0x1b1] sm:$0xff]
      %v648 = vld [vmem:[#allocation2 + $0x1c9] sm:$0xff]
      %v649 = vld [vmem:[#allocation2 + $0x1d1] sm:$0xff]
      %v650 = vld [vmem:[#allocation2 + $0x1e9] sm:$0xff]
      %v651 = vld [vmem:[#allocation2 + $0x1f1] sm:$0xff]
      %v652 = vlaneseq
      %v653 = vshrl.u32 %v652, 7
      %v654 = vsub.s32 0, %v653
      %v655 = vrot.slane %v619, %v654
      %v656 = vmul.f32 %v655, %v620
      %v657 = vmul.f32 %v655, %v621
      %v658 = vmul.f32 %v655, %v622
      %v659 = vmul.f32 %v655, %v623
      %v660 = vmul.f32 %v655, %v624
      %v661 = vmul.f32 %v655, %v625
      %v662 = vmul.f32 %v655, %v626
      %v663 = vmul.f32 %v655, %v627
      %v664 = vmul.f32 %v655, %v628
      %v665 = vmul.f32 %v655, %v629
      %v666 = vmul.f32 %v655, %v630
      %v667 = vmul.f32 %v655, %v631
      %v668 = vmul.f32 %v655, %v632
      %v669 = vmul.f32 %v655, %v633
      %v670 = vmul.f32 %v655, %v634
      %v671 = vmul.f32 %v655, %v635
      %v672 = vmul.f32 %v655, %v636
      %v673 = vmul.f32 %v655, %v637
      %v674 = vmul.f32 %v655, %v638
      %v675 = vmul.f32 %v655, %v639
      %v676 = vmul.f32 %v655, %v640
      %v677 = vmul.f32 %v655, %v641
      %v678 = vmul.f32 %v655, %v642
      %v679 = vmul.f32 %v655, %v643
      %v680 = vmul.f32 %v655, %v644
      %v681 = vmul.f32 %v655, %v645
      %v682 = vmul.f32 %v655, %v646
      %v683 = vmul.f32 %v655, %v647
      %v684 = vmul.f32 %v655, %v648
      %v685 = vmul.f32 %v655, %v649
      %v686 = vmul.f32 %v655, %v650
      %v687 = vmul.f32 %v655, %v651
      %v688 = vadd.f32 %v587, %v656
      %v689 = vadd.f32 %v588, %v657
      %v690 = vadd.f32 %v589, %v658
      %v691 = vadd.f32 %v590, %v659
      %v692 = vadd.f32 %v591, %v660
      %v693 = vadd.f32 %v592, %v661
      %v694 = vadd.f32 %v593, %v662
      %v695 = vadd.f32 %v594, %v663
      %v696 = vadd.f32 %v595, %v664
      %v697 = vadd.f32 %v596, %v665
      %v698 = vadd.f32 %v597, %v666
      %v699 = vadd.f32 %v598, %v667
      %v700 = vadd.f32 %v599, %v668
      %v701 = vadd.f32 %v600, %v669
      %v702 = vadd.f32 %v601, %v670
      %v703 = vadd.f32 %v602, %v671
      %v704 = vadd.f32 %v603, %v672
      %v705 = vadd.f32 %v604, %v673
      %v706 = vadd.f32 %v605, %v674
      %v707 = vadd.f32 %v606, %v675
      %v708 = vadd.f32 %v607, %v676
      %v709 = vadd.f32 %v608, %v677
      %v710 = vadd.f32 %v609, %v678
      %v711 = vadd.f32 %v610, %v679
      %v712 = vadd.f32 %v611, %v680
      %v713 = vadd.f32 %v612, %v681
      %v714 = vadd.f32 %v613, %v682
      %v715 = vadd.f32 %v614, %v683
      %v716 = vadd.f32 %v615, %v684
      %v717 = vadd.f32 %v616, %v685
      %v718 = vadd.f32 %v617, %v686
      %v719 = vadd.f32 %v618, %v687
      %v720 = vld [vmem:[%s213 + $0x3] sm:$0x1]
      %v721 = vld [vmem:[%s276 + $0x7] sm:$0xff]
      %v722 = vld [vmem:[%s276 + $0xf] sm:$0xff]
      %v723 = vld [vmem:[%s276 + $0x27] sm:$0xff]
      %v724 = vld [vmem:[%s276 + $0x2f] sm:$0xff]
      %v725 = vld [vmem:[%s276 + $0x47] sm:$0xff]
      %v726 = vld [vmem:[%s276 + $0x4f] sm:$0xff]
      %v727 = vld [vmem:[%s276 + $0x67] sm:$0xff]
      %v728 = vld [vmem:[%s276 + $0x6f] sm:$0xff]
      %v729 = vld [vmem:[%s276 + $0x87] sm:$0xff]
      %v730 = vld [vmem:[%s276 + $0x8f] sm:$0xff]
      %v731 = vld [vmem:[%s276 + $0xa7] sm:$0xff]
      %v732 = vld [vmem:[%s276 + $0xaf] sm:$0xff]
      %v733 = vld [vmem:[%s276 + $0xc7] sm:$0xff]
      %v734 = vld [vmem:[%s276 + $0xcf] sm:$0xff]
      %v735 = vld [vmem:[%s276 + $0xe7] sm:$0xff]
      %v736 = vld [vmem:[%s276 + $0xef] sm:$0xff]
      %v737 = vld [vmem:[%s276 + $0x107] sm:$0xff]
      %v738 = vld [vmem:[%s276 + $0x10f] sm:$0xff]
      %v739 = vld [vmem:[%s276 + $0x127] sm:$0xff]
      %v740 = vld [vmem:[%s276 + $0x12f] sm:$0xff]
      %v741 = vld [vmem:[%s276 + $0x147] sm:$0xff]
      %v742 = vld [vmem:[%s276 + $0x14f] sm:$0xff]
      %v743 = vld [vmem:[%s276 + $0x167] sm:$0xff]
      %v744 = vld [vmem:[%s276 + $0x16f] sm:$0xff]
      %v745 = vld [vmem:[%s276 + $0x187] sm:$0xff]
      %v746 = vld [vmem:[%s276 + $0x18f] sm:$0xff]
      %v747 = vld [vmem:[%s276 + $0x1a7] sm:$0xff]
      %v748 = vld [vmem:[%s276 + $0x1af] sm:$0xff]
      %v749 = vld [vmem:[%s276 + $0x1c7] sm:$0xff]
      %v750 = vld [vmem:[%s276 + $0x1cf] sm:$0xff]
      %v751 = vld [vmem:[%s276 + $0x1e7] sm:$0xff]
      %v752 = vld [vmem:[%s276 + $0x1ef] sm:$0xff]
      %v753 = vlaneseq
      %v754 = vshrl.u32 %v753, 7
      %v755 = vsub.s32 0, %v754
      %v756 = vrot.slane %v720, %v755
      %v757 = vmul.f32 %v756, %v721
      %v758 = vmul.f32 %v756, %v722
      %v759 = vmul.f32 %v756, %v723
      %v760 = vmul.f32 %v756, %v724
      %v761 = vmul.f32 %v756, %v725
      %v762 = vmul.f32 %v756, %v726
      %v763 = vmul.f32 %v756, %v727
      %v764 = vmul.f32 %v756, %v728
      %v765 = vmul.f32 %v756, %v729
      %v766 = vmul.f32 %v756, %v730
      %v767 = vmul.f32 %v756, %v731
      %v768 = vmul.f32 %v756, %v732
      %v769 = vmul.f32 %v756, %v733
      %v770 = vmul.f32 %v756, %v734
      %v771 = vmul.f32 %v756, %v735
      %v772 = vmul.f32 %v756, %v736
      %v773 = vmul.f32 %v756, %v737
      %v774 = vmul.f32 %v756, %v738
      %v775 = vmul.f32 %v756, %v739
      %v776 = vmul.f32 %v756, %v740
      %v777 = vmul.f32 %v756, %v741
      %v778 = vmul.f32 %v756, %v742
      %v779 = vmul.f32 %v756, %v743
      %v780 = vmul.f32 %v756, %v744
      %v781 = vmul.f32 %v756, %v745
      %v782 = vmul.f32 %v756, %v746
      %v783 = vmul.f32 %v756, %v747
      %v784 = vmul.f32 %v756, %v748
      %v785 = vmul.f32 %v756, %v749
      %v786 = vmul.f32 %v756, %v750
      %v787 = vmul.f32 %v756, %v751
      %v788 = vmul.f32 %v756, %v752
      %v789 = vadd.f32 %v688, %v757
      %v790 = vadd.f32 %v689, %v758
      %v791 = vadd.f32 %v690, %v759
      %v792 = vadd.f32 %v691, %v760
      %v793 = vadd.f32 %v692, %v761
      %v794 = vadd.f32 %v693, %v762
      %v795 = vadd.f32 %v694, %v763
      %v796 = vadd.f32 %v695, %v764
      %v797 = vadd.f32 %v696, %v765
      %v798 = vadd.f32 %v697, %v766
      %v799 = vadd.f32 %v698, %v767
      %v800 = vadd.f32 %v699, %v768
      %v801 = vadd.f32 %v700, %v769
      %v802 = vadd.f32 %v701, %v770
      %v803 = vadd.f32 %v702, %v771
      %v804 = vadd.f32 %v703, %v772
      %v805 = vadd.f32 %v704, %v773
      %v806 = vadd.f32 %v705, %v774
      %v807 = vadd.f32 %v706, %v775
      %v808 = vadd.f32 %v707, %v776
      %v809 = vadd.f32 %v708, %v777
      %v810 = vadd.f32 %v709, %v778
      %v811 = vadd.f32 %v710, %v779
      %v812 = vadd.f32 %v711, %v780
      %v813 = vadd.f32 %v712, %v781
      %v814 = vadd.f32 %v713, %v782
      %v815 = vadd.f32 %v714, %v783
      %v816 = vadd.f32 %v715, %v784
      %v817 = vadd.f32 %v716, %v785
      %v818 = vadd.f32 %v717, %v786
      %v819 = vadd.f32 %v718, %v787
      %v820 = vadd.f32 %v719, %v788
      %v821 = vld [vmem:[%s213 + $0x5] sm:$0x1]
      %v822 = vld [vmem:[%s276 + $0x9] sm:$0xff]
      %v823 = vld [vmem:[%s276 + $0x11] sm:$0xff]
      %v824 = vld [vmem:[%s276 + $0x29] sm:$0xff]
      %v825 = vld [vmem:[%s276 + $0x31] sm:$0xff]
      %v826 = vld [vmem:[%s276 + $0x49] sm:$0xff]
      %v827 = vld [vmem:[%s276 + $0x51] sm:$0xff]
      %v828 = vld [vmem:[%s276 + $0x69] sm:$0xff]
      %v829 = vld [vmem:[%s276 + $0x71] sm:$0xff]
      %v830 = vld [vmem:[%s276 + $0x89] sm:$0xff]
      %v831 = vld [vmem:[%s276 + $0x91] sm:$0xff]
      %v832 = vld [vmem:[%s276 + $0xa9] sm:$0xff]
      %v833 = vld [vmem:[%s276 + $0xb1] sm:$0xff]
      %v834 = vld [vmem:[%s276 + $0xc9] sm:$0xff]
      %v835 = vld [vmem:[%s276 + $0xd1] sm:$0xff]
      %v836 = vld [vmem:[%s276 + $0xe9] sm:$0xff]
      %v837 = vld [vmem:[%s276 + $0xf1] sm:$0xff]
      %v838 = vld [vmem:[%s276 + $0x109] sm:$0xff]
      %v839 = vld [vmem:[%s276 + $0x111] sm:$0xff]
      %v840 = vld [vmem:[%s276 + $0x129] sm:$0xff]
      %v841 = vld [vmem:[%s276 + $0x131] sm:$0xff]
      %v842 = vld [vmem:[%s276 + $0x149] sm:$0xff]
      %v843 = vld [vmem:[%s276 + $0x151] sm:$0xff]
      %v844 = vld [vmem:[%s276 + $0x169] sm:$0xff]
      %v845 = vld [vmem:[%s276 + $0x171] sm:$0xff]
      %v846 = vld [vmem:[%s276 + $0x189] sm:$0xff]
      %v847 = vld [vmem:[%s276 + $0x191] sm:$0xff]
      %v848 = vld [vmem:[%s276 + $0x1a9] sm:$0xff]
      %v849 = vld [vmem:[%s276 + $0x1b1] sm:$0xff]
      %v850 = vld [vmem:[%s276 + $0x1c9] sm:$0xff]
      %v851 = vld [vmem:[%s276 + $0x1d1] sm:$0xff]
      %v852 = vld [vmem:[%s276 + $0x1e9] sm:$0xff]
      %v853 = vld [vmem:[%s276 + $0x1f1] sm:$0xff]
      %v854 = vlaneseq
      %v855 = vshrl.u32 %v854, 7
      %v856 = vsub.s32 0, %v855
      %v857 = vrot.slane %v821, %v856
      %v858 = vmul.f32 %v857, %v822
      %v859 = vmul.f32 %v857, %v823
      %v860 = vmul.f32 %v857, %v824
      %v861 = vmul.f32 %v857, %v825
      %v862 = vmul.f32 %v857, %v826
      %v863 = vmul.f32 %v857, %v827
      %v864 = vmul.f32 %v857, %v828
      %v865 = vmul.f32 %v857, %v829
      %v866 = vmul.f32 %v857, %v830
      %v867 = vmul.f32 %v857, %v831
      %v868 = vmul.f32 %v857, %v832
      %v869 = vmul.f32 %v857, %v833
      %v870 = vmul.f32 %v857, %v834
      %v871 = vmul.f32 %v857, %v835
      %v872 = vmul.f32 %v857, %v836
      %v873 = vmul.f32 %v857, %v837
      %v874 = vmul.f32 %v857, %v838
      %v875 = vmul.f32 %v857, %v839
      %v876 = vmul.f32 %v857, %v840
      %v877 = vmul.f32 %v857, %v841
      %v878 = vmul.f32 %v857, %v842
      %v879 = vmul.f32 %v857, %v843
      %v880 = vmul.f32 %v857, %v844
      %v881 = vmul.f32 %v857, %v845
      %v882 = vmul.f32 %v857, %v846
      %v883 = vmul.f32 %v857, %v847
      %v884 = vmul.f32 %v857, %v848
      %v885 = vmul.f32 %v857, %v849
      %v886 = vmul.f32 %v857, %v850
      %v887 = vmul.f32 %v857, %v851
      %v888 = vmul.f32 %v857, %v852
      %v889 = vmul.f32 %v857, %v853
      %v890 = vadd.f32 %v789, %v858
      %v891 = vadd.f32 %v790, %v859
      %v892 = vadd.f32 %v791, %v860
      %v893 = vadd.f32 %v792, %v861
      %v894 = vadd.f32 %v793, %v862
      %v895 = vadd.f32 %v794, %v863
      %v896 = vadd.f32 %v795, %v864
      %v897 = vadd.f32 %v796, %v865
      %v898 = vadd.f32 %v797, %v866
      %v899 = vadd.f32 %v798, %v867
      %v900 = vadd.f32 %v799, %v868
      %v901 = vadd.f32 %v800, %v869
      %v902 = vadd.f32 %v801, %v870
      %v903 = vadd.f32 %v802, %v871
      %v904 = vadd.f32 %v803, %v872
      %v905 = vadd.f32 %v804, %v873
      %v906 = vadd.f32 %v805, %v874
      %v907 = vadd.f32 %v806, %v875
      %v908 = vadd.f32 %v807, %v876
      %v909 = vadd.f32 %v808, %v877
      %v910 = vadd.f32 %v809, %v878
      %v911 = vadd.f32 %v810, %v879
      %v912 = vadd.f32 %v811, %v880
      %v913 = vadd.f32 %v812, %v881
      %v914 = vadd.f32 %v813, %v882
      %v915 = vadd.f32 %v814, %v883
      %v916 = vadd.f32 %v815, %v884
      %v917 = vadd.f32 %v816, %v885
      %v918 = vadd.f32 %v817, %v886
      %v919 = vadd.f32 %v818, %v887
      %v920 = vadd.f32 %v819, %v888
      %v921 = vadd.f32 %v820, %v889
      %v922 = vld [vmem:[%s213 + $0x6] sm:$0x1]
      %s923 = scalar_lea.vmem [#allocation2], 64
      %v924 = vld [vmem:[%s923 + $0x7] sm:$0xff]
      %v925 = vld [vmem:[%s923 + $0xf] sm:$0xff]
      %v926 = vld [vmem:[%s923 + $0x27] sm:$0xff]
      %v927 = vld [vmem:[%s923 + $0x2f] sm:$0xff]
      %v928 = vld [vmem:[%s923 + $0x47] sm:$0xff]
      %v929 = vld [vmem:[%s923 + $0x4f] sm:$0xff]
      %v930 = vld [vmem:[%s923 + $0x67] sm:$0xff]
      %v931 = vld [vmem:[%s923 + $0x6f] sm:$0xff]
      %v932 = vld [vmem:[%s923 + $0x87] sm:$0xff]
      %v933 = vld [vmem:[%s923 + $0x8f] sm:$0xff]
      %v934 = vld [vmem:[%s923 + $0xa7] sm:$0xff]
      %v935 = vld [vmem:[%s923 + $0xaf] sm:$0xff]
      %v936 = vld [vmem:[%s923 + $0xc7] sm:$0xff]
      %v937 = vld [vmem:[%s923 + $0xcf] sm:$0xff]
      %v938 = vld [vmem:[%s923 + $0xe7] sm:$0xff]
      %v939 = vld [vmem:[%s923 + $0xef] sm:$0xff]
      %v940 = vld [vmem:[%s923 + $0x107] sm:$0xff]
      %v941 = vld [vmem:[%s923 + $0x10f] sm:$0xff]
      %v942 = vld [vmem:[%s923 + $0x127] sm:$0xff]
      %v943 = vld [vmem:[%s923 + $0x12f] sm:$0xff]
      %v944 = vld [vmem:[%s923 + $0x147] sm:$0xff]
      %v945 = vld [vmem:[%s923 + $0x14f] sm:$0xff]
      %v946 = vld [vmem:[%s923 + $0x167] sm:$0xff]
      %v947 = vld [vmem:[%s923 + $0x16f] sm:$0xff]
      %v948 = vld [vmem:[%s923 + $0x187] sm:$0xff]
      %v949 = vld [vmem:[%s923 + $0x18f] sm:$0xff]
      %v950 = vld [vmem:[%s923 + $0x1a7] sm:$0xff]
      %v951 = vld [vmem:[%s923 + $0x1af] sm:$0xff]
      %v952 = vld [vmem:[%s923 + $0x1c7] sm:$0xff]
      %v953 = vld [vmem:[%s923 + $0x1cf] sm:$0xff]
      %v954 = vld [vmem:[%s923 + $0x1e7] sm:$0xff]
      %v955 = vld [vmem:[%s923 + $0x1ef] sm:$0xff]
      %v956 = vlaneseq
      %v957 = vshrl.u32 %v956, 7
      %v958 = vsub.s32 0, %v957
      %v959 = vrot.slane %v922, %v958
      %v960 = vmul.f32 %v959, %v924
      %v961 = vmul.f32 %v959, %v925
      %v962 = vmul.f32 %v959, %v926
      %v963 = vmul.f32 %v959, %v927
      %v964 = vmul.f32 %v959, %v928
      %v965 = vmul.f32 %v959, %v929
      %v966 = vmul.f32 %v959, %v930
      %v967 = vmul.f32 %v959, %v931
      %v968 = vmul.f32 %v959, %v932
      %v969 = vmul.f32 %v959, %v933
      %v970 = vmul.f32 %v959, %v934
      %v971 = vmul.f32 %v959, %v935
      %v972 = vmul.f32 %v959, %v936
      %v973 = vmul.f32 %v959, %v937
      %v974 = vmul.f32 %v959, %v938
      %v975 = vmul.f32 %v959, %v939
      %v976 = vmul.f32 %v959, %v940
      %v977 = vmul.f32 %v959, %v941
      %v978 = vmul.f32 %v959, %v942
      %v979 = vmul.f32 %v959, %v943
      %v980 = vmul.f32 %v959, %v944
      %v981 = vmul.f32 %v959, %v945
      %v982 = vmul.f32 %v959, %v946
      %v983 = vmul.f32 %v959, %v947
      %v984 = vmul.f32 %v959, %v948
      %v985 = vmul.f32 %v959, %v949
      %v986 = vmul.f32 %v959, %v950
      %v987 = vmul.f32 %v959, %v951
      %v988 = vmul.f32 %v959, %v952
      %v989 = vmul.f32 %v959, %v953
      %v990 = vmul.f32 %v959, %v954
      %v991 = vmul.f32 %v959, %v955
      %v992 = vadd.f32 %v890, %v960
      %v993 = vadd.f32 %v891, %v961
      %v994 = vadd.f32 %v892, %v962
      %v995 = vadd.f32 %v893, %v963
      %v996 = vadd.f32 %v894, %v964
      %v997 = vadd.f32 %v895, %v965
      %v998 = vadd.f32 %v896, %v966
      %v999 = vadd.f32 %v897, %v967
      %v1000 = vadd.f32 %v898, %v968
      %v1001 = vadd.f32 %v899, %v969
      %v1002 = vadd.f32 %v900, %v970
      %v1003 = vadd.f32 %v901, %v971
      %v1004 = vadd.f32 %v902, %v972
      %v1005 = vadd.f32 %v903, %v973
      %v1006 = vadd.f32 %v904, %v974
      %v1007 = vadd.f32 %v905, %v975
      %v1008 = vadd.f32 %v906, %v976
      %v1009 = vadd.f32 %v907, %v977
      %v1010 = vadd.f32 %v908, %v978
      %v1011 = vadd.f32 %v909, %v979
      %v1012 = vadd.f32 %v910, %v980
      %v1013 = vadd.f32 %v911, %v981
      %v1014 = vadd.f32 %v912, %v982
      %v1015 = vadd.f32 %v913, %v983
      %v1016 = vadd.f32 %v914, %v984
      %v1017 = vadd.f32 %v915, %v985
      %v1018 = vadd.f32 %v916, %v986
      %v1019 = vadd.f32 %v917, %v987
      %v1020 = vadd.f32 %v918, %v988
      %v1021 = vadd.f32 %v919, %v989
      %v1022 = vadd.f32 %v920, %v990
      %v1023 = vadd.f32 %v921, %v991
      %v1024 = vld [vmem:[%s213 + $0x7] sm:$0x1]
      %v1025 = vld [vmem:[%s923 + $0x8] sm:$0xff]
      %v1026 = vld [vmem:[%s923 + $0x10] sm:$0xff]
      %v1027 = vld [vmem:[%s923 + $0x28] sm:$0xff]
      %v1028 = vld [vmem:[%s923 + $0x30] sm:$0xff]
      %v1029 = vld [vmem:[%s923 + $0x48] sm:$0xff]
      %v1030 = vld [vmem:[%s923 + $0x50] sm:$0xff]
      %v1031 = vld [vmem:[%s923 + $0x68] sm:$0xff]
      %v1032 = vld [vmem:[%s923 + $0x70] sm:$0xff]
      %v1033 = vld [vmem:[%s923 + $0x88] sm:$0xff]
      %v1034 = vld [vmem:[%s923 + $0x90] sm:$0xff]
      %v1035 = vld [vmem:[%s923 + $0xa8] sm:$0xff]
      %v1036 = vld [vmem:[%s923 + $0xb0] sm:$0xff]
      %v1037 = vld [vmem:[%s923 + $0xc8] sm:$0xff]
      %v1038 = vld [vmem:[%s923 + $0xd0] sm:$0xff]
      %v1039 = vld [vmem:[%s923 + $0xe8] sm:$0xff]
      %v1040 = vld [vmem:[%s923 + $0xf0] sm:$0xff]
      %v1041 = vld [vmem:[%s923 + $0x108] sm:$0xff]
      %v1042 = vld [vmem:[%s923 + $0x110] sm:$0xff]
      %v1043 = vld [vmem:[%s923 + $0x128] sm:$0xff]
      %v1044 = vld [vmem:[%s923 + $0x130] sm:$0xff]
      %v1045 = vld [vmem:[%s923 + $0x148] sm:$0xff]
      %v1046 = vld [vmem:[%s923 + $0x150] sm:$0xff]
      %v1047 = vld [vmem:[%s923 + $0x168] sm:$0xff]
      %v1048 = vld [vmem:[%s923 + $0x170] sm:$0xff]
      %v1049 = vld [vmem:[%s923 + $0x188] sm:$0xff]
      %v1050 = vld [vmem:[%s923 + $0x190] sm:$0xff]
      %v1051 = vld [vmem:[%s923 + $0x1a8] sm:$0xff]
      %v1052 = vld [vmem:[%s923 + $0x1b0] sm:$0xff]
      %v1053 = vld [vmem:[%s923 + $0x1c8] sm:$0xff]
      %v1054 = vld [vmem:[%s923 + $0x1d0] sm:$0xff]
      %v1055 = vld [vmem:[%s923 + $0x1e8] sm:$0xff]
      %v1056 = vld [vmem:[%s923 + $0x1f0] sm:$0xff]
      %v1057 = vlaneseq
      %v1058 = vshrl.u32 %v1057, 7
      %v1059 = vsub.s32 0, %v1058
      %v1060 = vrot.slane %v1024, %v1059
      %v1061 = vmul.f32 %v1060, %v1025
      %v1062 = vmul.f32 %v1060, %v1026
      %v1063 = vmul.f32 %v1060, %v1027
      %v1064 = vmul.f32 %v1060, %v1028
      %v1065 = vmul.f32 %v1060, %v1029
      %v1066 = vmul.f32 %v1060, %v1030
      %v1067 = vmul.f32 %v1060, %v1031
      %v1068 = vmul.f32 %v1060, %v1032
      %v1069 = vmul.f32 %v1060, %v1033
      %v1070 = vmul.f32 %v1060, %v1034
      %v1071 = vmul.f32 %v1060, %v1035
      %v1072 = vmul.f32 %v1060, %v1036
      %v1073 = vmul.f32 %v1060, %v1037
      %v1074 = vmul.f32 %v1060, %v1038
      %v1075 = vmul.f32 %v1060, %v1039
      %v1076 = vmul.f32 %v1060, %v1040
      %v1077 = vmul.f32 %v1060, %v1041
      %v1078 = vmul.f32 %v1060, %v1042
      %v1079 = vmul.f32 %v1060, %v1043
      %v1080 = vmul.f32 %v1060, %v1044
      %v1081 = vmul.f32 %v1060, %v1045
      %v1082 = vmul.f32 %v1060, %v1046
      %v1083 = vmul.f32 %v1060, %v1047
      %v1084 = vmul.f32 %v1060, %v1048
      %v1085 = vmul.f32 %v1060, %v1049
      %v1086 = vmul.f32 %v1060, %v1050
      %v1087 = vmul.f32 %v1060, %v1051
      %v1088 = vmul.f32 %v1060, %v1052
      %v1089 = vmul.f32 %v1060, %v1053
      %v1090 = vmul.f32 %v1060, %v1054
      %v1091 = vmul.f32 %v1060, %v1055
      %v1092 = vmul.f32 %v1060, %v1056
      %v1093 = vadd.f32 %v992, %v1061
      %v1094 = vadd.f32 %v993, %v1062
      %v1095 = vadd.f32 %v994, %v1063
      %v1096 = vadd.f32 %v995, %v1064
      %v1097 = vadd.f32 %v996, %v1065
      %v1098 = vadd.f32 %v997, %v1066
      %v1099 = vadd.f32 %v998, %v1067
      %v1100 = vadd.f32 %v999, %v1068
      %v1101 = vadd.f32 %v1000, %v1069
      %v1102 = vadd.f32 %v1001, %v1070
      %v1103 = vadd.f32 %v1002, %v1071
      %v1104 = vadd.f32 %v1003, %v1072
      %v1105 = vadd.f32 %v1004, %v1073
      %v1106 = vadd.f32 %v1005, %v1074
      %v1107 = vadd.f32 %v1006, %v1075
      %v1108 = vadd.f32 %v1007, %v1076
      %v1109 = vadd.f32 %v1008, %v1077
      %v1110 = vadd.f32 %v1009, %v1078
      %v1111 = vadd.f32 %v1010, %v1079
      %v1112 = vadd.f32 %v1011, %v1080
      %v1113 = vadd.f32 %v1012, %v1081
      %v1114 = vadd.f32 %v1013, %v1082
      %v1115 = vadd.f32 %v1014, %v1083
      %v1116 = vadd.f32 %v1015, %v1084
      %v1117 = vadd.f32 %v1016, %v1085
      %v1118 = vadd.f32 %v1017, %v1086
      %v1119 = vadd.f32 %v1018, %v1087
      %v1120 = vadd.f32 %v1019, %v1088
      %v1121 = vadd.f32 %v1020, %v1089
      %v1122 = vadd.f32 %v1021, %v1090
      %v1123 = vadd.f32 %v1022, %v1091
      %v1124 = vadd.f32 %v1023, %v1092
      %v1125 = vld [vmem:[%s213 + $0x8] sm:$0x1]
      %v1126 = vld [vmem:[%s923 + $0x9] sm:$0xff]
      %v1127 = vld [vmem:[%s923 + $0x11] sm:$0xff]
      %v1128 = vld [vmem:[%s923 + $0x29] sm:$0xff]
      %v1129 = vld [vmem:[%s923 + $0x31] sm:$0xff]
      %v1130 = vld [vmem:[%s923 + $0x49] sm:$0xff]
      %v1131 = vld [vmem:[%s923 + $0x51] sm:$0xff]
      %v1132 = vld [vmem:[%s923 + $0x69] sm:$0xff]
      %v1133 = vld [vmem:[%s923 + $0x71] sm:$0xff]
      %v1134 = vld [vmem:[%s923 + $0x89] sm:$0xff]
      %v1135 = vld [vmem:[%s923 + $0x91] sm:$0xff]
      %v1136 = vld [vmem:[%s923 + $0xa9] sm:$0xff]
      %v1137 = vld [vmem:[%s923 + $0xb1] sm:$0xff]
      %v1138 = vld [vmem:[%s923 + $0xc9] sm:$0xff]
      %v1139 = vld [vmem:[%s923 + $0xd1] sm:$0xff]
      %v1140 = vld [vmem:[%s923 + $0xe9] sm:$0xff]
      %v1141 = vld [vmem:[%s923 + $0xf1] sm:$0xff]
      %v1142 = vld [vmem:[%s923 + $0x109] sm:$0xff]
      %v1143 = vld [vmem:[%s923 + $0x111] sm:$0xff]
      %v1144 = vld [vmem:[%s923 + $0x129] sm:$0xff]
      %v1145 = vld [vmem:[%s923 + $0x131] sm:$0xff]
      %v1146 = vld [vmem:[%s923 + $0x149] sm:$0xff]
      %v1147 = vld [vmem:[%s923 + $0x151] sm:$0xff]
      %v1148 = vld [vmem:[%s923 + $0x169] sm:$0xff]
      %v1149 = vld [vmem:[%s923 + $0x171] sm:$0xff]
      %v1150 = vld [vmem:[%s923 + $0x189] sm:$0xff]
      %v1151 = vld [vmem:[%s923 + $0x191] sm:$0xff]
      %v1152 = vld [vmem:[%s923 + $0x1a9] sm:$0xff]
      %v1153 = vld [vmem:[%s923 + $0x1b1] sm:$0xff]
      %v1154 = vld [vmem:[%s923 + $0x1c9] sm:$0xff]
      %v1155 = vld [vmem:[%s923 + $0x1d1] sm:$0xff]
      %v1156 = vld [vmem:[%s923 + $0x1e9] sm:$0xff]
      %v1157 = vld [vmem:[%s923 + $0x1f1] sm:$0xff]
      %v1158 = vlaneseq
      %v1159 = vshrl.u32 %v1158, 7
      %v1160 = vsub.s32 0, %v1159
      %v1161 = vrot.slane %v1125, %v1160
      %v1162 = vmul.f32 %v1161, %v1126
      %v1163 = vmul.f32 %v1161, %v1127
      %v1164 = vmul.f32 %v1161, %v1128
      %v1165 = vmul.f32 %v1161, %v1129
      %v1166 = vmul.f32 %v1161, %v1130
      %v1167 = vmul.f32 %v1161, %v1131
      %v1168 = vmul.f32 %v1161, %v1132
      %v1169 = vmul.f32 %v1161, %v1133
      %v1170 = vmul.f32 %v1161, %v1134
      %v1171 = vmul.f32 %v1161, %v1135
      %v1172 = vmul.f32 %v1161, %v1136
      %v1173 = vmul.f32 %v1161, %v1137
      %v1174 = vmul.f32 %v1161, %v1138
      %v1175 = vmul.f32 %v1161, %v1139
      %v1176 = vmul.f32 %v1161, %v1140
      %v1177 = vmul.f32 %v1161, %v1141
      %v1178 = vmul.f32 %v1161, %v1142
      %v1179 = vmul.f32 %v1161, %v1143
      %v1180 = vmul.f32 %v1161, %v1144
      %v1181 = vmul.f32 %v1161, %v1145
      %v1182 = vmul.f32 %v1161, %v1146
      %v1183 = vmul.f32 %v1161, %v1147
      %v1184 = vmul.f32 %v1161, %v1148
      %v1185 = vmul.f32 %v1161, %v1149
      %v1186 = vmul.f32 %v1161, %v1150
      %v1187 = vmul.f32 %v1161, %v1151
      %v1188 = vmul.f32 %v1161, %v1152
      %v1189 = vmul.f32 %v1161, %v1153
      %v1190 = vmul.f32 %v1161, %v1154
      %v1191 = vmul.f32 %v1161, %v1155
      %v1192 = vmul.f32 %v1161, %v1156
      %v1193 = vmul.f32 %v1161, %v1157
      %v1194 = vadd.f32 %v1093, %v1162
      %v1195 = vadd.f32 %v1094, %v1163
      %v1196 = vadd.f32 %v1095, %v1164
      %v1197 = vadd.f32 %v1096, %v1165
      %v1198 = vadd.f32 %v1097, %v1166
      %v1199 = vadd.f32 %v1098, %v1167
      %v1200 = vadd.f32 %v1099, %v1168
      %v1201 = vadd.f32 %v1100, %v1169
      %v1202 = vadd.f32 %v1101, %v1170
      %v1203 = vadd.f32 %v1102, %v1171
      %v1204 = vadd.f32 %v1103, %v1172
      %v1205 = vadd.f32 %v1104, %v1173
      %v1206 = vadd.f32 %v1105, %v1174
      %v1207 = vadd.f32 %v1106, %v1175
      %v1208 = vadd.f32 %v1107, %v1176
      %v1209 = vadd.f32 %v1108, %v1177
      %v1210 = vadd.f32 %v1109, %v1178
      %v1211 = vadd.f32 %v1110, %v1179
      %v1212 = vadd.f32 %v1111, %v1180
      %v1213 = vadd.f32 %v1112, %v1181
      %v1214 = vadd.f32 %v1113, %v1182
      %v1215 = vadd.f32 %v1114, %v1183
      %v1216 = vadd.f32 %v1115, %v1184
      %v1217 = vadd.f32 %v1116, %v1185
      %v1218 = vadd.f32 %v1117, %v1186
      %v1219 = vadd.f32 %v1118, %v1187
      %v1220 = vadd.f32 %v1119, %v1188
      %v1221 = vadd.f32 %v1120, %v1189
      %v1222 = vadd.f32 %v1121, %v1190
      %v1223 = vadd.f32 %v1122, %v1191
      %v1224 = vadd.f32 %v1123, %v1192
      %v1225 = vadd.f32 %v1124, %v1193
      %1226 = vst.msk [vmem:[%s232] sm:$0xff] %vm265, %v1194
      %1227 = vst.msk [vmem:[%s232 + $0x8] sm:$0xff] %vm265, %v1195
      %1228 = vst.msk [vmem:[%s232 + $0x10] sm:$0xff] %vm265, %v1196
      %1229 = vst.msk [vmem:[%s232 + $0x18] sm:$0xff] %vm265, %v1197
      %1230 = vst.msk [vmem:[%s232 + $0x20] sm:$0xff] %vm265, %v1198
      %1231 = vst.msk [vmem:[%s232 + $0x28] sm:$0xff] %vm265, %v1199
      %1232 = vst.msk [vmem:[%s232 + $0x30] sm:$0xff] %vm265, %v1200
      %1233 = vst.msk [vmem:[%s232 + $0x38] sm:$0xff] %vm265, %v1201
      %1234 = vst.msk [vmem:[%s232 + $0x40] sm:$0xff] %vm265, %v1202
      %1235 = vst.msk [vmem:[%s232 + $0x48] sm:$0xff] %vm265, %v1203
      %1236 = vst.msk [vmem:[%s232 + $0x50] sm:$0xff] %vm265, %v1204
      %1237 = vst.msk [vmem:[%s232 + $0x58] sm:$0xff] %vm265, %v1205
      %1238 = vst.msk [vmem:[%s232 + $0x60] sm:$0xff] %vm265, %v1206
      %1239 = vst.msk [vmem:[%s232 + $0x68] sm:$0xff] %vm265, %v1207
      %1240 = vst.msk [vmem:[%s232 + $0x70] sm:$0xff] %vm265, %v1208
      %1241 = vst.msk [vmem:[%s232 + $0x78] sm:$0xff] %vm265, %v1209
      %1242 = vst.msk [vmem:[%s232 + $0x80] sm:$0xff] %vm265, %v1210
      %1243 = vst.msk [vmem:[%s232 + $0x88] sm:$0xff] %vm265, %v1211
      %1244 = vst.msk [vmem:[%s232 + $0x90] sm:$0xff] %vm265, %v1212
      %1245 = vst.msk [vmem:[%s232 + $0x98] sm:$0xff] %vm265, %v1213
      %1246 = vst.msk [vmem:[%s232 + $0xa0] sm:$0xff] %vm265, %v1214
      %1247 = vst.msk [vmem:[%s232 + $0xa8] sm:$0xff] %vm265, %v1215
      %1248 = vst.msk [vmem:[%s232 + $0xb0] sm:$0xff] %vm265, %v1216
      %1249 = vst.msk [vmem:[%s232 + $0xb8] sm:$0xff] %vm265, %v1217
      %1250 = vst.msk [vmem:[%s232 + $0xc0] sm:$0xff] %vm265, %v1218
      %1251 = vst.msk [vmem:[%s232 + $0xc8] sm:$0xff] %vm265, %v1219
      %1252 = vst.msk [vmem:[%s232 + $0xd0] sm:$0xff] %vm265, %v1220
      %1253 = vst.msk [vmem:[%s232 + $0xd8] sm:$0xff] %vm265, %v1221
      %1254 = vst.msk [vmem:[%s232 + $0xe0] sm:$0xff] %vm265, %v1222
      %1255 = vst.msk [vmem:[%s232 + $0xe8] sm:$0xff] %vm265, %v1223
      %1256 = vst.msk [vmem:[%s232 + $0xf0] sm:$0xff] %vm265, %v1224
      %1257 = vst.msk [vmem:[%s232 + $0xf8] sm:$0xff] %vm265, %v1225
      %p1258 = scmp.lt.s32.totalorder %s19, 1
      %s1259 = scalar_select %p1258, %s19, 1
      %p1260 = scmp.lt.s32.totalorder %s18, 0
      %s1261 = scalar_select %p1260, %s18, 0
      %s1262 = smul.addr %s1259, 32
      %s1263 = sadd.s32 %s1261, %s1262
      %s1264 = smul.addr %s1263, 8
      %s1265 = scalar_lea.vmem %s3, %s1264
      // Predicated region
      $region33: #{tpu_custom_call.1} parent=31 // pred_check
        %p1266 = pneg %p126
      $region34: #{tpu_custom_call.1} parent=31 // pred_check_branch
        %1268 = sbr.rel (%p1266) target = $region36
      $region35: #{tpu_custom_call.1} parent=31 // pred_region
        _
      $region36: #{tpu_custom_call.1} parent=31 // pred_fallthru
        _
    $region32: #{tpu_custom_call.1} parent=5 // pred_fallthru
      _
    %p1269 = scmp.le.s32.totalorder 2, %s9
    // Predicated region
    $region37: #{tpu_custom_call.1} parent=5 // pred_check
      %p1270 = pneg %p1269
    $region38: #{tpu_custom_call.1} parent=5 // pred_check_branch
      %1272 = sbr.rel (%p1270) target = $region40
    $region39: #{tpu_custom_call.1} parent=5 // pred_region
      %s1273 = ssub.s32 %s9, 2
      // Predicated region
      $region41: #{tpu_custom_call.1} parent=39 // pred_check
        %p1274 = pneg %p132
      $region42: #{tpu_custom_call.1} parent=39 // pred_check_branch
        %1276 = sbr.rel (%p1274) target = $region44
      $region43: #{tpu_custom_call.1} parent=39 // pred_region
        %p1277 = scmp.lt.s32.totalorder %s21, 1
        %s1278 = scalar_select %p1277, %s21, 1
        %p1279 = scmp.lt.s32.totalorder %s20, 0
        %s1280 = scalar_select %p1279, %s20, 0
        %s1281 = smul.addr %s1278, 32
        %s1282 = sadd.s32 %s1280, %s1281
        %s1283 = smul.addr %s1282, 8
        %s1284 = scalar_lea.vmem %s3, %s1283
      $region44: #{tpu_custom_call.1} parent=39 // pred_fallthru
        _
    $region40: #{tpu_custom_call.1} parent=5 // pred_fallthru
      _
  $region6: #{tpu_custom_call.1} parent=0 // loop_footer
    %s13 = sadd.s32 1, %s9
  $region7: #{tpu_custom_call.1} parent=0 // loop_footer_branch
    %8 = sbr.rel target = $region3
  $region8: #{tpu_custom_call.1} parent=0 // loop_exit
    _

</llo_original>
